<compile_context>
chip_gen: v7x
topology: tpu7x:2x2x1
jax: 0.10.0
libtpu: 0.0.40
codegen_flags: <defaults>
</compile_context>

<pallas_src>
import functools

import jax
import jax.numpy as jnp
from jax.experimental import pallas as pl
from jax.experimental.pallas import tpu as pltpu

LANE = 128  # TPU lane width; packed feature dims are padded to multiples of this.


def _round_up(x: int, m: int) -> int:
    return ((x + m - 1) // m) * m


def _cdiv(a: int, b: int) -> int:
    return -(-a // b)


def _choose_batch_tile(batch: int) -> int:
    """Batch-tile rows: <= 512, sublane-aligned, >= 2 balanced tiles if batch >= 16."""
    if batch < 16:
        return _round_up(max(batch, 1), 8)
    num_tiles = max(2, _cdiv(batch, 512))
    return _round_up(_cdiv(batch, num_tiles), 8)


# ----------------------------------------------------------------------------
# Fused kernel: both heads, all layers, all ensemble members, one batch tile.
# The ensemble lives in the lane dimension (packed / block-diagonal weights),
# so there is NO per-network loop inside the kernel.
# ----------------------------------------------------------------------------
def _fused_mlp_kernel(x_ref, *refs, n_obs_layers, n_rew_layers, compute_dtype):
    n_obs = 2 * n_obs_layers
    n_rew = 2 * n_rew_layers
    obs_refs = refs[:n_obs]
    rew_refs = refs[n_obs:n_obs + n_rew]
    out_ref = refs[n_obs + n_rew]

    def run_head(layer_refs, n_layers):
        # Re-read x per head (cheap VMEM load) instead of keeping it live
        # across the whole fused chain -> lower vreg pressure / no spills.
        h = x_ref[...]
        for i in range(n_layers):          # static unroll over layers only
            w = layer_refs[2 * i][...]      # packed (rows, cols) weights
            b = layer_refs[2 * i + 1][...]  # (1, cols) bias, f32
            a = jnp.dot(h.astype(compute_dtype), w,
                        preferred_element_type=jnp.float32) + b
            h = a * jax.nn.sigmoid(a) if i != n_layers - 1 else a  # swish
        return h

    obs_h = run_head(obs_refs, n_obs_layers)
    rew_h = run_head(rew_refs, n_rew_layers)
    # The two heads' final layers write disjoint lane ranges (reward offset
    # after obs), so one add merges both into a single lane-dense output slab.
    out_ref[...] = (obs_h + rew_h).astype(out_ref.dtype)


# ----------------------------------------------------------------------------
# Wrapper: pack the ensemble into lane-packed / block-diagonal 2-D weights,
# build specs, one pallas_call over batch tiles.
# ----------------------------------------------------------------------------
def _pack_layer(w, b, in_rows, out_cols, col_offset, block_diag, w_dtype):
    """Pack an ensemble layer (n, d_in, d_out) into one padded 2-D matrix."""
    n, d_in, d_out = w.shape
    w_p = jnp.zeros((in_rows, out_cols), jnp.float32)
    b_p = jnp.zeros((1, out_cols), jnp.float32)
    for k in range(n):
        c0 = col_offset + k * d_out
        r0 = k * d_in if block_diag else 0   # layer 0 shares the input rows
        w_p = w_p.at[r0:r0 + d_in, c0:c0 + d_out].set(w[k].astype(jnp.float32))
        b_p = b_p.at[0, c0:c0 + d_out].set(b[k].reshape(-1).astype(jnp.float32))
    return w_p.astype(w_dtype), b_p


def _pack_head(params, in_rows, final_cols, final_col_offset, w_dtype):
    """Pack all layers of one head; returns flat [w0, b0, w1, b1, ...]."""
    n_networks = params[0][0].shape[0]
    flat = []
    rows = in_rows
    n_layers = len(params)
    for i, (w, b) in enumerate(params):
        _, _, d_out = w.shape
        if i == n_layers - 1:
            cols, off = final_cols, final_col_offset
        else:
            cols, off = _round_up(n_networks * d_out, LANE), 0
        w_p, b_p = _pack_layer(w, b, rows, cols, off,
                               block_diag=(i > 0), w_dtype=w_dtype)
        flat.extend([w_p, b_p])
        rows = cols
    return flat


def multi_head_mlp_forward(x, obs_params, rew_params, n_networks,
                           use_bf16_matmul=False):
    batch, in_dim = x.shape
    obs_d_out = obs_params[-1][0].shape[-1]   # 2 * obs_dim
    rew_d_out = rew_params[-1][0].shape[-1]   # 2
    obs_used = n_networks * obs_d_out
    rew_used = n_networks * rew_d_out
    out_cols = _round_up(obs_used + rew_used, LANE)

    # Optional bf16 MXU operands (f32 accumulation). Off by default to keep
    # the tight f32 reference tolerance; enable on v6e/v7x for throughput.
    w_dtype = jnp.bfloat16 if use_bf16_matmul else x.dtype
    compute_dtype = jnp.bfloat16 if use_bf16_matmul else x.dtype

    tb = _choose_batch_tile(batch)
    b_pad = _round_up(batch, tb)
    num_tiles = b_pad // tb

    in_pad = _round_up(in_dim, LANE)
    x_pad = jnp.zeros((b_pad, in_pad), x.dtype).at[:batch, :in_dim].set(x)

    obs_flat = _pack_head(obs_params, in_pad, out_cols, 0, w_dtype)
    rew_flat = _pack_head(rew_params, in_pad, out_cols, obs_used, w_dtype)
    flat_inputs = [x_pad] + obs_flat + rew_flat

    in_specs = [pl.BlockSpec((tb, in_pad), lambda i: (i, 0))]
    for arr in obs_flat + rew_flat:
        # Constant block index -> fetched once, stays VMEM-resident across all
        # batch-tile grid steps.
        in_specs.append(pl.BlockSpec(arr.shape, lambda i: (0, 0)))

    kernel = functools.partial(
        _fused_mlp_kernel,
        n_obs_layers=len(obs_params),
        n_rew_layers=len(rew_params),
        compute_dtype=compute_dtype,
    )

    out_pad = pl.pallas_call(
        kernel,
        out_shape=jax.ShapeDtypeStruct((b_pad, out_cols), x.dtype),
        grid=(num_tiles,),
        in_specs=in_specs,
        out_specs=pl.BlockSpec((tb, out_cols), lambda i: (i, 0)),
        compiler_params=pltpu.CompilerParams(
            dimension_semantics=("parallel",),     # batch tiles split across TCs (v7x)
            vmem_limit_bytes=32 * 1024 * 1024,      # explicit (v5e default is 16 MiB)
        ),
    )(*flat_inputs)

    obs = out_pad[:batch, :obs_used]
    obs = obs.reshape(batch, n_networks, obs_d_out).transpose(1, 0, 2)
    reward = out_pad[:batch, obs_used:obs_used + rew_used]
    reward = reward.reshape(batch, n_networks, rew_d_out).transpose(1, 0, 2)
    return obs, reward


# ----------------------------------------------------------------------------
# Parameter construction (deterministic, synthetic init).
# ----------------------------------------------------------------------------
def _init_layer(key, n_networks, d_in, d_out):
    kw, _ = jax.random.split(key)
    w = jax.random.normal(kw, (n_networks, d_in, d_out), jnp.float32) / jnp.sqrt(
        jnp.float32(d_in)
    )
    b = jnp.zeros((n_networks, 1, d_out), jnp.float32)
    return w, b


def init_multi_head_mlp(key, obs_dim, act_dim, hidden_layer_sizes, n_networks):
    in_dim = obs_dim + act_dim

    # obs head: in -> h0 -> ... -> obs_dim*2 (last layer linear)
    obs_dims = [in_dim, *hidden_layer_sizes, obs_dim * 2]
    obs_params = []
    for i in range(len(obs_dims) - 1):
        key, sub = jax.random.split(key)
        obs_params.append(_init_layer(sub, n_networks, obs_dims[i], obs_dims[i + 1]))

    # reward head: in -> 64 -> 64 -> 64 -> 2 (last layer linear)
    rew_dims = [in_dim, 64, 64, 64, 2]
    rew_params = []
    for i in range(len(rew_dims) - 1):
        key, sub = jax.random.split(key)
        rew_params.append(_init_layer(sub, n_networks, rew_dims[i], rew_dims[i + 1]))

    return obs_params, rew_params


if __name__ == "__main__":
    obs_dim = 8
    act_dim = 4
    hidden_layer_sizes = (32, 32)
    n_networks = 3
    batch = 48  # exercises 2 balanced batch tiles (tb=24)

    key = jax.random.PRNGKey(0)
    key_params, key_x = jax.random.split(key)

    obs_params, rew_params = init_multi_head_mlp(
        key_params, obs_dim, act_dim, hidden_layer_sizes, n_networks
    )

    x = jax.random.normal(key_x, (batch, obs_dim + act_dim), jnp.float32)

    obs, reward = multi_head_mlp_forward(x, obs_params, rew_params, n_networks)
    obs = jax.block_until_ready(obs)
    reward = jax.block_until_ready(reward)

    assert obs.shape == (n_networks, batch, obs_dim * 2)
    assert reward.shape == (n_networks, batch, 2)

    # Pure-JAX reference check (mirrors MultiHeadMlp.forward).
    def ref_forward(x, params):
        h = jnp.broadcast_to(x[None], (n_networks, *x.shape))
        for i, (w, b) in enumerate(params):
            h = jnp.einsum("nbi,nio->nbo", h, w) + b
            if i != len(params) - 1:
                h = h * jax.nn.sigmoid(h)
        return h

    obs_ref = ref_forward(x, obs_params)
    rew_ref = ref_forward(x, rew_params)
    assert jnp.allclose(obs, obs_ref, atol=1e-4, rtol=1e-4)
    assert jnp.allclose(reward, rew_ref, atol=1e-4, rtol=1e-4)

    print("KERNEL_OK")
</pallas_src>

<mosaic_0001>
module attributes {stable_mosaic.version = 11 : i64} {
  func.func @_fused_mlp_kernel(%arg0: i32, %arg1: memref<24x128xf32, #tpu.memory_space<vmem>>, %arg2: memref<128x128xf32, #tpu.memory_space<vmem>>, %arg3: memref<1x128xf32, #tpu.memory_space<vmem>>, %arg4: memref<128x128xf32, #tpu.memory_space<vmem>>, %arg5: memref<1x128xf32, #tpu.memory_space<vmem>>, %arg6: memref<128x128xf32, #tpu.memory_space<vmem>>, %arg7: memref<1x128xf32, #tpu.memory_space<vmem>>, %arg8: memref<128x256xf32, #tpu.memory_space<vmem>>, %arg9: memref<1x256xf32, #tpu.memory_space<vmem>>, %arg10: memref<256x256xf32, #tpu.memory_space<vmem>>, %arg11: memref<1x256xf32, #tpu.memory_space<vmem>>, %arg12: memref<256x256xf32, #tpu.memory_space<vmem>>, %arg13: memref<1x256xf32, #tpu.memory_space<vmem>>, %arg14: memref<256x128xf32, #tpu.memory_space<vmem>>, %arg15: memref<1x128xf32, #tpu.memory_space<vmem>>, %arg16: memref<24x128xf32, #tpu.memory_space<vmem>>) attributes {dimension_semantics = [#tpu.dimension_semantics<parallel>], iteration_bounds = array<i64: 2>, scalar_prefetch = 0 : i64, scratch_operands = 0 : i64, tpu.core_type = #tpu.core_type<tc>, window_params = [{transform_indices = @transform_0, window_bounds = array<i64: 24, 128>}, {pipeline_mode = #tpu.pipeline_mode<synchronous>, transform_indices = @transform_1, window_bounds = array<i64: 128, 128>}, {pipeline_mode = #tpu.pipeline_mode<synchronous>, transform_indices = @transform_2, window_bounds = array<i64: 1, 128>}, {pipeline_mode = #tpu.pipeline_mode<synchronous>, transform_indices = @transform_3, window_bounds = array<i64: 128, 128>}, {pipeline_mode = #tpu.pipeline_mode<synchronous>, transform_indices = @transform_4, window_bounds = array<i64: 1, 128>}, {pipeline_mode = #tpu.pipeline_mode<synchronous>, transform_indices = @transform_5, window_bounds = array<i64: 128, 128>}, {pipeline_mode = #tpu.pipeline_mode<synchronous>, transform_indices = @transform_6, window_bounds = array<i64: 1, 128>}, {pipeline_mode = #tpu.pipeline_mode<synchronous>, transform_indices = @transform_7, window_bounds = array<i64: 128, 256>}, {pipeline_mode = #tpu.pipeline_mode<synchronous>, transform_indices = @transform_8, window_bounds = array<i64: 1, 256>}, {pipeline_mode = #tpu.pipeline_mode<synchronous>, transform_indices = @transform_9, window_bounds = array<i64: 256, 256>}, {pipeline_mode = #tpu.pipeline_mode<synchronous>, transform_indices = @transform_10, window_bounds = array<i64: 1, 256>}, {pipeline_mode = #tpu.pipeline_mode<synchronous>, transform_indices = @transform_11, window_bounds = array<i64: 256, 256>}, {pipeline_mode = #tpu.pipeline_mode<synchronous>, transform_indices = @transform_12, window_bounds = array<i64: 1, 256>}, {pipeline_mode = #tpu.pipeline_mode<synchronous>, transform_indices = @transform_13, window_bounds = array<i64: 256, 128>}, {pipeline_mode = #tpu.pipeline_mode<synchronous>, transform_indices = @transform_14, window_bounds = array<i64: 1, 128>}, {transform_indices = @transform_15, window_bounds = array<i64: 24, 128>}]} {
    %c0 = arith.constant 0 : index
    %c0_0 = arith.constant 0 : index
    %0 = vector.load %arg1[%c0, %c0_0] : memref<24x128xf32, #tpu.memory_space<vmem>>, vector<24x128xf32>
    %c0_1 = arith.constant 0 : index
    %c0_2 = arith.constant 0 : index
    %1 = vector.load %arg2[%c0_1, %c0_2] : memref<128x128xf32, #tpu.memory_space<vmem>>, vector<128x128xf32>
    %c0_3 = arith.constant 0 : index
    %c0_4 = arith.constant 0 : index
    %2 = vector.load %arg3[%c0_3, %c0_4] : memref<1x128xf32, #tpu.memory_space<vmem>>, vector<1x128xf32>
    %cst = arith.constant dense<0.000000e+00> : vector<24x128xf32>
    %3 = tpu.matmul %0, %1, %cst {dimension_numbers = #tpu.dot_dimension_numbers<[1], [0], [0], [1], [0, 0, 1, 1], [], []>} : vector<24x128xf32>, vector<128x128xf32>, vector<24x128xf32> -> vector<24x128xf32>
    %4 = vector.broadcast %2 : vector<1x128xf32> to vector<24x128xf32>
    %5 = arith.addf %3, %4 : vector<24x128xf32>
    %6 = arith.negf %5 : vector<24x128xf32>
    %7 = math.exp %6 : vector<24x128xf32>
    %cst_5 = arith.constant 1.000000e+00 : f32
    %8 = vector.broadcast %cst_5 : f32 to vector<24x128xf32>
    %9 = arith.addf %8, %7 : vector<24x128xf32>
    %10 = arith.divf %8, %9 : vector<24x128xf32>
    %11 = arith.mulf %5, %10 : vector<24x128xf32>
    %c0_6 = arith.constant 0 : index
    %c0_7 = arith.constant 0 : index
    %12 = vector.load %arg4[%c0_6, %c0_7] : memref<128x128xf32, #tpu.memory_space<vmem>>, vector<128x128xf32>
    %c0_8 = arith.constant 0 : index
    %c0_9 = arith.constant 0 : index
    %13 = vector.load %arg5[%c0_8, %c0_9] : memref<1x128xf32, #tpu.memory_space<vmem>>, vector<1x128xf32>
    %cst_10 = arith.constant dense<0.000000e+00> : vector<24x128xf32>
    %14 = tpu.matmul %11, %12, %cst_10 {dimension_numbers = #tpu.dot_dimension_numbers<[1], [0], [0], [1], [0, 0, 1, 1], [], []>} : vector<24x128xf32>, vector<128x128xf32>, vector<24x128xf32> -> vector<24x128xf32>
    %15 = vector.broadcast %13 : vector<1x128xf32> to vector<24x128xf32>
    %16 = arith.addf %14, %15 : vector<24x128xf32>
    %17 = arith.negf %16 : vector<24x128xf32>
    %18 = math.exp %17 : vector<24x128xf32>
    %cst_11 = arith.constant 1.000000e+00 : f32
    %19 = vector.broadcast %cst_11 : f32 to vector<24x128xf32>
    %20 = arith.addf %19, %18 : vector<24x128xf32>
    %21 = arith.divf %19, %20 : vector<24x128xf32>
    %22 = arith.mulf %16, %21 : vector<24x128xf32>
    %c0_12 = arith.constant 0 : index
    %c0_13 = arith.constant 0 : index
    %23 = vector.load %arg6[%c0_12, %c0_13] : memref<128x128xf32, #tpu.memory_space<vmem>>, vector<128x128xf32>
    %c0_14 = arith.constant 0 : index
    %c0_15 = arith.constant 0 : index
    %24 = vector.load %arg7[%c0_14, %c0_15] : memref<1x128xf32, #tpu.memory_space<vmem>>, vector<1x128xf32>
    %cst_16 = arith.constant dense<0.000000e+00> : vector<24x128xf32>
    %25 = tpu.matmul %22, %23, %cst_16 {dimension_numbers = #tpu.dot_dimension_numbers<[1], [0], [0], [1], [0, 0, 1, 1], [], []>} : vector<24x128xf32>, vector<128x128xf32>, vector<24x128xf32> -> vector<24x128xf32>
    %26 = vector.broadcast %24 : vector<1x128xf32> to vector<24x128xf32>
    %27 = arith.addf %25, %26 : vector<24x128xf32>
    %c0_17 = arith.constant 0 : index
    %c0_18 = arith.constant 0 : index
    %28 = vector.load %arg1[%c0_17, %c0_18] : memref<24x128xf32, #tpu.memory_space<vmem>>, vector<24x128xf32>
    %c0_19 = arith.constant 0 : index
    %c0_20 = arith.constant 0 : index
    %29 = vector.load %arg8[%c0_19, %c0_20] : memref<128x256xf32, #tpu.memory_space<vmem>>, vector<128x256xf32>
    %c0_21 = arith.constant 0 : index
    %c0_22 = arith.constant 0 : index
    %30 = vector.load %arg9[%c0_21, %c0_22] : memref<1x256xf32, #tpu.memory_space<vmem>>, vector<1x256xf32>
    %cst_23 = arith.constant dense<0.000000e+00> : vector<24x256xf32>
    %31 = tpu.matmul %28, %29, %cst_23 {dimension_numbers = #tpu.dot_dimension_numbers<[1], [0], [0], [1], [0, 0, 1, 1], [], []>} : vector<24x128xf32>, vector<128x256xf32>, vector<24x256xf32> -> vector<24x256xf32>
    %32 = vector.broadcast %30 : vector<1x256xf32> to vector<24x256xf32>
    %33 = arith.addf %31, %32 : vector<24x256xf32>
    %34 = arith.negf %33 : vector<24x256xf32>
    %35 = math.exp %34 : vector<24x256xf32>
    %cst_24 = arith.constant 1.000000e+00 : f32
    %36 = vector.broadcast %cst_24 : f32 to vector<24x256xf32>
    %37 = arith.addf %36, %35 : vector<24x256xf32>
    %38 = arith.divf %36, %37 : vector<24x256xf32>
    %39 = arith.mulf %33, %38 : vector<24x256xf32>
    %c0_25 = arith.constant 0 : index
    %c0_26 = arith.constant 0 : index
    %40 = vector.load %arg10[%c0_25, %c0_26] : memref<256x256xf32, #tpu.memory_space<vmem>>, vector<256x256xf32>
    %c0_27 = arith.constant 0 : index
    %c0_28 = arith.constant 0 : index
    %41 = vector.load %arg11[%c0_27, %c0_28] : memref<1x256xf32, #tpu.memory_space<vmem>>, vector<1x256xf32>
    %cst_29 = arith.constant dense<0.000000e+00> : vector<24x256xf32>
    %42 = tpu.matmul %39, %40, %cst_29 {dimension_numbers = #tpu.dot_dimension_numbers<[1], [0], [0], [1], [0, 0, 1, 1], [], []>} : vector<24x256xf32>, vector<256x256xf32>, vector<24x256xf32> -> vector<24x256xf32>
    %43 = vector.broadcast %41 : vector<1x256xf32> to vector<24x256xf32>
    %44 = arith.addf %42, %43 : vector<24x256xf32>
    %45 = arith.negf %44 : vector<24x256xf32>
    %46 = math.exp %45 : vector<24x256xf32>
    %cst_30 = arith.constant 1.000000e+00 : f32
    %47 = vector.broadcast %cst_30 : f32 to vector<24x256xf32>
    %48 = arith.addf %47, %46 : vector<24x256xf32>
    %49 = arith.divf %47, %48 : vector<24x256xf32>
    %50 = arith.mulf %44, %49 : vector<24x256xf32>
    %c0_31 = arith.constant 0 : index
    %c0_32 = arith.constant 0 : index
    %51 = vector.load %arg12[%c0_31, %c0_32] : memref<256x256xf32, #tpu.memory_space<vmem>>, vector<256x256xf32>
    %c0_33 = arith.constant 0 : index
    %c0_34 = arith.constant 0 : index
    %52 = vector.load %arg13[%c0_33, %c0_34] : memref<1x256xf32, #tpu.memory_space<vmem>>, vector<1x256xf32>
    %cst_35 = arith.constant dense<0.000000e+00> : vector<24x256xf32>
    %53 = tpu.matmul %50, %51, %cst_35 {dimension_numbers = #tpu.dot_dimension_numbers<[1], [0], [0], [1], [0, 0, 1, 1], [], []>} : vector<24x256xf32>, vector<256x256xf32>, vector<24x256xf32> -> vector<24x256xf32>
    %54 = vector.broadcast %52 : vector<1x256xf32> to vector<24x256xf32>
    %55 = arith.addf %53, %54 : vector<24x256xf32>
    %56 = arith.negf %55 : vector<24x256xf32>
    %57 = math.exp %56 : vector<24x256xf32>
    %cst_36 = arith.constant 1.000000e+00 : f32
    %58 = vector.broadcast %cst_36 : f32 to vector<24x256xf32>
    %59 = arith.addf %58, %57 : vector<24x256xf32>
    %60 = arith.divf %58, %59 : vector<24x256xf32>
    %61 = arith.mulf %55, %60 : vector<24x256xf32>
    %c0_37 = arith.constant 0 : index
    %c0_38 = arith.constant 0 : index
    %62 = vector.load %arg14[%c0_37, %c0_38] : memref<256x128xf32, #tpu.memory_space<vmem>>, vector<256x128xf32>
    %c0_39 = arith.constant 0 : index
    %c0_40 = arith.constant 0 : index
    %63 = vector.load %arg15[%c0_39, %c0_40] : memref<1x128xf32, #tpu.memory_space<vmem>>, vector<1x128xf32>
    %cst_41 = arith.constant dense<0.000000e+00> : vector<24x128xf32>
    %64 = tpu.matmul %61, %62, %cst_41 {dimension_numbers = #tpu.dot_dimension_numbers<[1], [0], [0], [1], [0, 0, 1, 1], [], []>} : vector<24x256xf32>, vector<256x128xf32>, vector<24x128xf32> -> vector<24x128xf32>
    %65 = vector.broadcast %63 : vector<1x128xf32> to vector<24x128xf32>
    %66 = arith.addf %64, %65 : vector<24x128xf32>
    %67 = arith.addf %27, %66 : vector<24x128xf32>
    %c0_42 = arith.constant 0 : index
    %c0_43 = arith.constant 0 : index
    %68 = vector.load %arg16[%c0_42, %c0_43] : memref<24x128xf32, #tpu.memory_space<vmem>>, vector<24x128xf32>
    tpu.vector_store %arg16[%c0_42, %c0_43], %67 {strides = array<i32>} : memref<24x128xf32, #tpu.memory_space<vmem>>, vector<24x128xf32>,
    return
  }
  func.func @transform_0(%arg0: i32) -> (i32, i32) {
    %c0_i32 = arith.constant 0 : i32
    %c0_i32_0 = arith.constant 0 : i32
    return %arg0, %c0_i32 : i32, i32
  }
  func.func @transform_1(%arg0: i32) -> (i32, i32) {
    %c0_i32 = arith.constant 0 : i32
    %c0_i32_0 = arith.constant 0 : i32
    %c0_i32_1 = arith.constant 0 : i32
    return %c0_i32, %c0_i32_0 : i32, i32
  }
  func.func @transform_2(%arg0: i32) -> (i32, i32) {
    %c0_i32 = arith.constant 0 : i32
    %c0_i32_0 = arith.constant 0 : i32
    %c0_i32_1 = arith.constant 0 : i32
    return %c0_i32, %c0_i32_0 : i32, i32
  }
  func.func @transform_3(%arg0: i32) -> (i32, i32) {
    %c0_i32 = arith.constant 0 : i32
    %c0_i32_0 = arith.constant 0 : i32
    %c0_i32_1 = arith.constant 0 : i32
    return %c0_i32, %c0_i32_0 : i32, i32
  }
  func.func @transform_4(%arg0: i32) -> (i32, i32) {
    %c0_i32 = arith.constant 0 : i32
    %c0_i32_0 = arith.constant 0 : i32
    %c0_i32_1 = arith.constant 0 : i32
    return %c0_i32, %c0_i32_0 : i32, i32
  }
  func.func @transform_5(%arg0: i32) -> (i32, i32) {
    %c0_i32 = arith.constant 0 : i32
    %c0_i32_0 = arith.constant 0 : i32
    %c0_i32_1 = arith.constant 0 : i32
    return %c0_i32, %c0_i32_0 : i32, i32
  }
  func.func @transform_6(%arg0: i32) -> (i32, i32) {
    %c0_i32 = arith.constant 0 : i32
    %c0_i32_0 = arith.constant 0 : i32
    %c0_i32_1 = arith.constant 0 : i32
    return %c0_i32, %c0_i32_0 : i32, i32
  }
  func.func @transform_7(%arg0: i32) -> (i32, i32) {
    %c0_i32 = arith.constant 0 : i32
    %c0_i32_0 = arith.constant 0 : i32
    %c0_i32_1 = arith.constant 0 : i32
    return %c0_i32, %c0_i32_0 : i32, i32
  }
  func.func @transform_8(%arg0: i32) -> (i32, i32) {
    %c0_i32 = arith.constant 0 : i32
    %c0_i32_0 = arith.constant 0 : i32
    %c0_i32_1 = arith.constant 0 : i32
    return %c0_i32, %c0_i32_0 : i32, i32
  }
  func.func @transform_9(%arg0: i32) -> (i32, i32) {
    %c0_i32 = arith.constant 0 : i32
    %c0_i32_0 = arith.constant 0 : i32
    %c0_i32_1 = arith.constant 0 : i32
    return %c0_i32, %c0_i32_0 : i32, i32
  }
  func.func @transform_10(%arg0: i32) -> (i32, i32) {
    %c0_i32 = arith.constant 0 : i32
    %c0_i32_0 = arith.constant 0 : i32
    %c0_i32_1 = arith.constant 0 : i32
    return %c0_i32, %c0_i32_0 : i32, i32
  }
  func.func @transform_11(%arg0: i32) -> (i32, i32) {
    %c0_i32 = arith.constant 0 : i32
    %c0_i32_0 = arith.constant 0 : i32
    %c0_i32_1 = arith.constant 0 : i32
    return %c0_i32, %c0_i32_0 : i32, i32
  }
  func.func @transform_12(%arg0: i32) -> (i32, i32) {
    %c0_i32 = arith.constant 0 : i32
    %c0_i32_0 = arith.constant 0 : i32
    %c0_i32_1 = arith.constant 0 : i32
    return %c0_i32, %c0_i32_0 : i32, i32
  }
  func.func @transform_13(%arg0: i32) -> (i32, i32) {
    %c0_i32 = arith.constant 0 : i32
    %c0_i32_0 = arith.constant 0 : i32
    %c0_i32_1 = arith.constant 0 : i32
    return %c0_i32, %c0_i32_0 : i32, i32
  }
  func.func @transform_14(%arg0: i32) -> (i32, i32) {
    %c0_i32 = arith.constant 0 : i32
    %c0_i32_0 = arith.constant 0 : i32
    %c0_i32_1 = arith.constant 0 : i32
    return %c0_i32, %c0_i32_0 : i32, i32
  }
  func.func @transform_15(%arg0: i32) -> (i32, i32) {
    %c0_i32 = arith.constant 0 : i32
    %c0_i32_0 = arith.constant 0 : i32
    return %arg0, %c0_i32 : i32, i32
  }
}

</mosaic_0001>

<llo_original>
// kernel: tpu_custom_call.1
$region0: #{tpu_custom_call.1}
  #allocation0 [shape = 'u32[]', space=smem, size = 0x4, offset = 0x4, fixed_abs, tag = 'smem constant byte address 0x4 - core index']
  #allocation1 [shape = 'u32[144,128]{1,0:T(1,128)}', space=vmem, size = 0x12000, scoped, tag = 'internal scratch']
  %s0 = inlined_call_operand.hbm [shape: f32[48,128], index: 0, kind: input, shape index: {}]
  %s1 = inlined_call_operand.hbm [shape: f32[128,128], index: 1, kind: input, shape index: {}]
  %s2 = inlined_call_operand.vmem [shape: f32[1,128], index: 2, kind: input, shape index: {}]
  %s3 = inlined_call_operand.hbm [shape: f32[128,128], index: 3, kind: input, shape index: {}]
  %s4 = inlined_call_operand.vmem [shape: f32[1,128], index: 4, kind: input, shape index: {}]
  %s5 = inlined_call_operand.hbm [shape: f32[128,128], index: 5, kind: input, shape index: {}]
  %s6 = inlined_call_operand.vmem [shape: f32[1,128], index: 6, kind: input, shape index: {}]
  %s7 = inlined_call_operand.hbm [shape: f32[128,256], index: 7, kind: input, shape index: {}]
  %s8 = inlined_call_operand.vmem [shape: f32[1,256], index: 8, kind: input, shape index: {}]
  %s9 = inlined_call_operand.hbm [shape: f32[256,256], index: 9, kind: input, shape index: {}]
  %s10 = inlined_call_operand.vmem [shape: f32[1,256], index: 10, kind: input, shape index: {}]
  %s11 = inlined_call_operand.hbm [shape: f32[256,256], index: 11, kind: input, shape index: {}]
  %s12 = inlined_call_operand.vmem [shape: f32[1,256], index: 12, kind: input, shape index: {}]
  %s13 = inlined_call_operand.hbm [shape: f32[256,128], index: 13, kind: input, shape index: {}]
  %s14 = inlined_call_operand.vmem [shape: f32[1,128], index: 14, kind: input, shape index: {}]
  %s15 = inlined_call_operand.hbm [shape: f32[48,128], index: 15, kind: output, shape index: {}]
  %s16 = sld [smem:[#allocation0]]
  $region125: #{tpu_custom_call.1} parent=0
    _
  %s18 = ssub.s32 1, %s16
  %s19 = scalar_select 0, %s18, %s16
  $region1: #{tpu_custom_call.1} parent=0
    #allocation2 [shape = 'u8[24576]{0}', space=vmem, size = 0x6000, scoped, tag = 'input window, operand 0']
    #allocation3 [shape = 's32[2]{0}', space=sflag, size = 0x8, scoped, tag = 'scoped memory for tpu_custom_call.1']
    #allocation4 [shape = 's32[2]{0}', space=sflag, size = 0x8, scoped, tag = 'scoped memory for tpu_custom_call.1']
    #allocation5 [shape = 'u8[65536]{0}', space=vmem, size = 0x10000, scoped, tag = 'input window, operand 1, single buffered']
    #allocation6 [shape = 's32[1]{0}', space=sflag, size = 0x4, scoped, tag = 'scoped memory for tpu_custom_call.1']
    #allocation7 [shape = 'u8[65536]{0}', space=vmem, size = 0x10000, scoped, tag = 'input window, operand 3, single buffered']
    #allocation8 [shape = 'u8[65536]{0}', space=vmem, size = 0x10000, scoped, tag = 'input window, operand 5, single buffered']
    #allocation9 [shape = 's32[1]{0}', space=sflag, size = 0x4, scoped, tag = 'scoped memory for tpu_custom_call.1']
    #allocation10 [shape = 'u8[131072]{0}', space=vmem, size = 0x20000, scoped, tag = 'input window, operand 7, single buffered']
    #allocation11 [shape = 'u8[262144]{0}', space=vmem, size = 0x40000, scoped, tag = 'input window, operand 9, single buffered']
    #allocation12 [shape = 's32[1]{0}', space=sflag, size = 0x4, scoped, tag = 'scoped memory for tpu_custom_call.1']
    #allocation13 [shape = 'u8[262144]{0}', space=vmem, size = 0x40000, scoped, tag = 'input window, operand 11, single buffered']
    #allocation14 [shape = 'u8[131072]{0}', space=vmem, size = 0x20000, scoped, tag = 'input window, operand 13, single buffered']
    #allocation15 [shape = 's32[1]{0}', space=sflag, size = 0x4, scoped, tag = 'scoped memory for tpu_custom_call.1']
    #allocation16 [shape = 'u8[24576]{0}', space=vmem, size = 0x6000, scoped, tag = 'output window, operand 0']
    %20 = vsyncpa [#allocation3], 0
    %s21 = scalar_lea.sflag [#allocation3], 1
    %22 = vsyncpa %s21, 0
    %23 = vsyncpa [#allocation6], 0
    %24 = vsyncpa [#allocation9], 0
    %25 = vsyncpa [#allocation12], 0
    %26 = vsyncpa [#allocation15], 0
    %27 = vsyncpa [#allocation4], 0
    %s28 = scalar_lea.sflag [#allocation4], 1
    %29 = vsyncpa %s28, 0
    loop: start=0, step=1, limit=4
    $region2: #{tpu_custom_call.1} parent=1 // loop_pre_header
      _
    $region3: #{tpu_custom_call.1} parent=1 // loop_header
      %s31 = sphi 0, %s35
      %p32 = scmp.ge.s32.totalorder %s31, 4
      %s41 = sphi 0, %s43
      %s44 = sphi 0, %s41
      %s45 = sphi 0, %s44
      %s61 = sphi 0, %s45
      %s65 = sphi 0, %s65
      %s67 = sphi 0, %s65
      %s68 = sphi 0, %s67
      %s82 = sphi 0, %s68
      %s86 = sphi 0, %s86
      %s88 = sphi 0, %s86
      %s89 = sphi 0, %s88
      %s103 = sphi 0, %s89
      %s107 = sphi 0, %s107
      %s109 = sphi 0, %s107
      %s110 = sphi 0, %s109
      %s124 = sphi 0, %s110
      %s128 = sphi 0, %s128
      %s130 = sphi 0, %s128
      %s131 = sphi 0, %s130
      %s145 = sphi 0, %s131
      %s149 = sphi 0, %s149
      %s151 = sphi 0, %s149
      %s152 = sphi 0, %s151
      %s166 = sphi 0, %s152
      %s170 = sphi 0, %s170
      %s172 = sphi 0, %s170
      %s173 = sphi 0, %s172
      %s187 = sphi 0, %s173
      %s191 = sphi 0, %s191
      %s193 = sphi 0, %s191
      %s194 = sphi 0, %s193
      %s208 = sphi 0, %s194
      %s212 = sphi 0, %s212
      %s214 = sphi 0, %s212
      %s215 = sphi 0, %s214
      %s229 = sphi 0, %s215
      %s233 = sphi 0, %s233
      %s235 = sphi 0, %s233
      %s236 = sphi 0, %s235
      %s250 = sphi 0, %s236
      %s254 = sphi 0, %s254
      %s256 = sphi 0, %s254
      %s257 = sphi 0, %s256
      %s271 = sphi 0, %s257
      %s275 = sphi 0, %s275
      %s277 = sphi 0, %s275
      %s278 = sphi 0, %s277
      %s292 = sphi 0, %s278
      %s296 = sphi 0, %s296
      %s298 = sphi 0, %s296
      %s299 = sphi 0, %s298
      %s313 = sphi 0, %s299
      %s317 = sphi 0, %s317
      %s319 = sphi 0, %s317
      %s320 = sphi 0, %s319
      %s334 = sphi 0, %s320
      %s338 = sphi 0, %s338
      %s340 = sphi 0, %s338
      %s341 = sphi 0, %s340
      %s355 = sphi 0, %s341
      %s361 = sphi 0, %s363
      %s364 = sphi 0, %s361
      %s365 = sphi 0, %s364
      %s381 = sphi 0, %s365
    $region4: #{tpu_custom_call.1} parent=1 // loop_header_branch
      %34 = sbr.rel (%p32) target = $region8
    $region5: #{tpu_custom_call.1} parent=1 // loop_body
      %s36 = ssub.s32 %s31, 1
      %s37 = ssub.s32 %s31, 2
      %s38 = sadd.s32 %s31, 1
      %s39 = ssub.s32 %s31, %s38
      %p40 = scmp.eq.s32.totalorder %s39, 0
      %s42 = sadd.s32 %s41, 1
      %s43 = scalar_select %p40, %s41, %s42
      %p46 = pneg %p40
      %p47 = scmp.eq.s32.totalorder %s31, 1
      %p48 = por %p46, %p47
      %p49 = scmp.ne.s32.totalorder %s41, %s44
      %p50 = scmp.eq.s32.totalorder %s31, 0
      %p51 = por %p49, %p50
      %p52 = scmp.ne.s32.totalorder %s41, %s44
      %p53 = scmp.eq.s32.totalorder %s36, 1
      %p54 = por %p52, %p53
      %p55 = scmp.ne.s32.totalorder %s44, %s45
      %p56 = scmp.eq.s32.totalorder %s36, 0
      %p57 = por %p55, %p56
      %p58 = scmp.ne.s32.totalorder %s44, %s45
      %p59 = scmp.eq.s32.totalorder %s37, 1
      %p60 = por %p58, %p59
      %p62 = scmp.ne.s32.totalorder %s45, %s61
      %p63 = scmp.eq.s32.totalorder %s37, 0
      %p64 = por %p62, %p63
      %s66 = sadd.s32 %s65, 1
      %p69 = scmp.eq.s32.totalorder %s31, 1
      %p70 = scmp.ne.s32.totalorder %s65, %s67
      %p71 = scmp.eq.s32.totalorder %s31, 0
      %p72 = por %p70, %p71
      %p73 = scmp.ne.s32.totalorder %s65, %s67
      %p74 = scmp.eq.s32.totalorder %s36, 1
      %p75 = por %p73, %p74
      %p76 = scmp.ne.s32.totalorder %s67, %s68
      %p77 = scmp.eq.s32.totalorder %s36, 0
      %p78 = por %p76, %p77
      %p79 = scmp.ne.s32.totalorder %s67, %s68
      %p80 = scmp.eq.s32.totalorder %s37, 1
      %p81 = por %p79, %p80
      %p83 = scmp.ne.s32.totalorder %s68, %s82
      %p84 = scmp.eq.s32.totalorder %s37, 0
      %p85 = por %p83, %p84
      %s87 = sadd.s32 %s86, 1
      %p90 = scmp.eq.s32.totalorder %s31, 1
      %p91 = scmp.ne.s32.totalorder %s86, %s88
      %p92 = scmp.eq.s32.totalorder %s31, 0
      %p93 = por %p91, %p92
      %p94 = scmp.ne.s32.totalorder %s86, %s88
      %p95 = scmp.eq.s32.totalorder %s36, 1
      %p96 = por %p94, %p95
      %p97 = scmp.ne.s32.totalorder %s88, %s89
      %p98 = scmp.eq.s32.totalorder %s36, 0
      %p99 = por %p97, %p98
      %p100 = scmp.ne.s32.totalorder %s88, %s89
      %p101 = scmp.eq.s32.totalorder %s37, 1
      %p102 = por %p100, %p101
      %p104 = scmp.ne.s32.totalorder %s89, %s103
      %p105 = scmp.eq.s32.totalorder %s37, 0
      %p106 = por %p104, %p105
      %s108 = sadd.s32 %s107, 1
      %p111 = scmp.eq.s32.totalorder %s31, 1
      %p112 = scmp.ne.s32.totalorder %s107, %s109
      %p113 = scmp.eq.s32.totalorder %s31, 0
      %p114 = por %p112, %p113
      %p115 = scmp.ne.s32.totalorder %s107, %s109
      %p116 = scmp.eq.s32.totalorder %s36, 1
      %p117 = por %p115, %p116
      %p118 = scmp.ne.s32.totalorder %s109, %s110
      %p119 = scmp.eq.s32.totalorder %s36, 0
      %p120 = por %p118, %p119
      %p121 = scmp.ne.s32.totalorder %s109, %s110
      %p122 = scmp.eq.s32.totalorder %s37, 1
      %p123 = por %p121, %p122
      %p125 = scmp.ne.s32.totalorder %s110, %s124
      %p126 = scmp.eq.s32.totalorder %s37, 0
      %p127 = por %p125, %p126
      %s129 = sadd.s32 %s128, 1
      %p132 = scmp.eq.s32.totalorder %s31, 1
      %p133 = scmp.ne.s32.totalorder %s128, %s130
      %p134 = scmp.eq.s32.totalorder %s31, 0
      %p135 = por %p133, %p134
      %p136 = scmp.ne.s32.totalorder %s128, %s130
      %p137 = scmp.eq.s32.totalorder %s36, 1
      %p138 = por %p136, %p137
      %p139 = scmp.ne.s32.totalorder %s130, %s131
      %p140 = scmp.eq.s32.totalorder %s36, 0
      %p141 = por %p139, %p140
      %p142 = scmp.ne.s32.totalorder %s130, %s131
      %p143 = scmp.eq.s32.totalorder %s37, 1
      %p144 = por %p142, %p143
      %p146 = scmp.ne.s32.totalorder %s131, %s145
      %p147 = scmp.eq.s32.totalorder %s37, 0
      %p148 = por %p146, %p147
      %s150 = sadd.s32 %s149, 1
      %p153 = scmp.eq.s32.totalorder %s31, 1
      %p154 = scmp.ne.s32.totalorder %s149, %s151
      %p155 = scmp.eq.s32.totalorder %s31, 0
      %p156 = por %p154, %p155
      %p157 = scmp.ne.s32.totalorder %s149, %s151
      %p158 = scmp.eq.s32.totalorder %s36, 1
      %p159 = por %p157, %p158
      %p160 = scmp.ne.s32.totalorder %s151, %s152
      %p161 = scmp.eq.s32.totalorder %s36, 0
      %p162 = por %p160, %p161
      %p163 = scmp.ne.s32.totalorder %s151, %s152
      %p164 = scmp.eq.s32.totalorder %s37, 1
      %p165 = por %p163, %p164
      %p167 = scmp.ne.s32.totalorder %s152, %s166
      %p168 = scmp.eq.s32.totalorder %s37, 0
      %p169 = por %p167, %p168
      %s171 = sadd.s32 %s170, 1
      %p174 = scmp.eq.s32.totalorder %s31, 1
      %p175 = scmp.ne.s32.totalorder %s170, %s172
      %p176 = scmp.eq.s32.totalorder %s31, 0
      %p177 = por %p175, %p176
      %p178 = scmp.ne.s32.totalorder %s170, %s172
      %p179 = scmp.eq.s32.totalorder %s36, 1
      %p180 = por %p178, %p179
      %p181 = scmp.ne.s32.totalorder %s172, %s173
      %p182 = scmp.eq.s32.totalorder %s36, 0
      %p183 = por %p181, %p182
      %p184 = scmp.ne.s32.totalorder %s172, %s173
      %p185 = scmp.eq.s32.totalorder %s37, 1
      %p186 = por %p184, %p185
      %p188 = scmp.ne.s32.totalorder %s173, %s187
      %p189 = scmp.eq.s32.totalorder %s37, 0
      %p190 = por %p188, %p189
      %s192 = sadd.s32 %s191, 1
      %p195 = scmp.eq.s32.totalorder %s31, 1
      %p196 = scmp.ne.s32.totalorder %s191, %s193
      %p197 = scmp.eq.s32.totalorder %s31, 0
      %p198 = por %p196, %p197
      %p199 = scmp.ne.s32.totalorder %s191, %s193
      %p200 = scmp.eq.s32.totalorder %s36, 1
      %p201 = por %p199, %p200
      %p202 = scmp.ne.s32.totalorder %s193, %s194
      %p203 = scmp.eq.s32.totalorder %s36, 0
      %p204 = por %p202, %p203
      %p205 = scmp.ne.s32.totalorder %s193, %s194
      %p206 = scmp.eq.s32.totalorder %s37, 1
      %p207 = por %p205, %p206
      %p209 = scmp.ne.s32.totalorder %s194, %s208
      %p210 = scmp.eq.s32.totalorder %s37, 0
      %p211 = por %p209, %p210
      %s213 = sadd.s32 %s212, 1
      %p216 = scmp.eq.s32.totalorder %s31, 1
      %p217 = scmp.ne.s32.totalorder %s212, %s214
      %p218 = scmp.eq.s32.totalorder %s31, 0
      %p219 = por %p217, %p218
      %p220 = scmp.ne.s32.totalorder %s212, %s214
      %p221 = scmp.eq.s32.totalorder %s36, 1
      %p222 = por %p220, %p221
      %p223 = scmp.ne.s32.totalorder %s214, %s215
      %p224 = scmp.eq.s32.totalorder %s36, 0
      %p225 = por %p223, %p224
      %p226 = scmp.ne.s32.totalorder %s214, %s215
      %p227 = scmp.eq.s32.totalorder %s37, 1
      %p228 = por %p226, %p227
      %p230 = scmp.ne.s32.totalorder %s215, %s229
      %p231 = scmp.eq.s32.totalorder %s37, 0
      %p232 = por %p230, %p231
      %s234 = sadd.s32 %s233, 1
      %p237 = scmp.eq.s32.totalorder %s31, 1
      %p238 = scmp.ne.s32.totalorder %s233, %s235
      %p239 = scmp.eq.s32.totalorder %s31, 0
      %p240 = por %p238, %p239
      %p241 = scmp.ne.s32.totalorder %s233, %s235
      %p242 = scmp.eq.s32.totalorder %s36, 1
      %p243 = por %p241, %p242
      %p244 = scmp.ne.s32.totalorder %s235, %s236
      %p245 = scmp.eq.s32.totalorder %s36, 0
      %p246 = por %p244, %p245
      %p247 = scmp.ne.s32.totalorder %s235, %s236
      %p248 = scmp.eq.s32.totalorder %s37, 1
      %p249 = por %p247, %p248
      %p251 = scmp.ne.s32.totalorder %s236, %s250
      %p252 = scmp.eq.s32.totalorder %s37, 0
      %p253 = por %p251, %p252
      %s255 = sadd.s32 %s254, 1
      %p258 = scmp.eq.s32.totalorder %s31, 1
      %p259 = scmp.ne.s32.totalorder %s254, %s256
      %p260 = scmp.eq.s32.totalorder %s31, 0
      %p261 = por %p259, %p260
      %p262 = scmp.ne.s32.totalorder %s254, %s256
      %p263 = scmp.eq.s32.totalorder %s36, 1
      %p264 = por %p262, %p263
      %p265 = scmp.ne.s32.totalorder %s256, %s257
      %p266 = scmp.eq.s32.totalorder %s36, 0
      %p267 = por %p265, %p266
      %p268 = scmp.ne.s32.totalorder %s256, %s257
      %p269 = scmp.eq.s32.totalorder %s37, 1
      %p270 = por %p268, %p269
      %p272 = scmp.ne.s32.totalorder %s257, %s271
      %p273 = scmp.eq.s32.totalorder %s37, 0
      %p274 = por %p272, %p273
      %s276 = sadd.s32 %s275, 1
      %p279 = scmp.eq.s32.totalorder %s31, 1
      %p280 = scmp.ne.s32.totalorder %s275, %s277
      %p281 = scmp.eq.s32.totalorder %s31, 0
      %p282 = por %p280, %p281
      %p283 = scmp.ne.s32.totalorder %s275, %s277
      %p284 = scmp.eq.s32.totalorder %s36, 1
      %p285 = por %p283, %p284
      %p286 = scmp.ne.s32.totalorder %s277, %s278
      %p287 = scmp.eq.s32.totalorder %s36, 0
      %p288 = por %p286, %p287
      %p289 = scmp.ne.s32.totalorder %s277, %s278
      %p290 = scmp.eq.s32.totalorder %s37, 1
      %p291 = por %p289, %p290
      %p293 = scmp.ne.s32.totalorder %s278, %s292
      %p294 = scmp.eq.s32.totalorder %s37, 0
      %p295 = por %p293, %p294
      %s297 = sadd.s32 %s296, 1
      %p300 = scmp.eq.s32.totalorder %s31, 1
      %p301 = scmp.ne.s32.totalorder %s296, %s298
      %p302 = scmp.eq.s32.totalorder %s31, 0
      %p303 = por %p301, %p302
      %p304 = scmp.ne.s32.totalorder %s296, %s298
      %p305 = scmp.eq.s32.totalorder %s36, 1
      %p306 = por %p304, %p305
      %p307 = scmp.ne.s32.totalorder %s298, %s299
      %p308 = scmp.eq.s32.totalorder %s36, 0
      %p309 = por %p307, %p308
      %p310 = scmp.ne.s32.totalorder %s298, %s299
      %p311 = scmp.eq.s32.totalorder %s37, 1
      %p312 = por %p310, %p311
      %p314 = scmp.ne.s32.totalorder %s299, %s313
      %p315 = scmp.eq.s32.totalorder %s37, 0
      %p316 = por %p314, %p315
      %s318 = sadd.s32 %s317, 1
      %p321 = scmp.eq.s32.totalorder %s31, 1
      %p322 = scmp.ne.s32.totalorder %s317, %s319
      %p323 = scmp.eq.s32.totalorder %s31, 0
      %p324 = por %p322, %p323
      %p325 = scmp.ne.s32.totalorder %s317, %s319
      %p326 = scmp.eq.s32.totalorder %s36, 1
      %p327 = por %p325, %p326
      %p328 = scmp.ne.s32.totalorder %s319, %s320
      %p329 = scmp.eq.s32.totalorder %s36, 0
      %p330 = por %p328, %p329
      %p331 = scmp.ne.s32.totalorder %s319, %s320
      %p332 = scmp.eq.s32.totalorder %s37, 1
      %p333 = por %p331, %p332
      %p335 = scmp.ne.s32.totalorder %s320, %s334
      %p336 = scmp.eq.s32.totalorder %s37, 0
      %p337 = por %p335, %p336
      %s339 = sadd.s32 %s338, 1
      %p342 = scmp.eq.s32.totalorder %s31, 1
      %p343 = scmp.ne.s32.totalorder %s338, %s340
      %p344 = scmp.eq.s32.totalorder %s31, 0
      %p345 = por %p343, %p344
      %p346 = scmp.ne.s32.totalorder %s338, %s340
      %p347 = scmp.eq.s32.totalorder %s36, 1
      %p348 = por %p346, %p347
      %p349 = scmp.ne.s32.totalorder %s340, %s341
      %p350 = scmp.eq.s32.totalorder %s36, 0
      %p351 = por %p349, %p350
      %p352 = scmp.ne.s32.totalorder %s340, %s341
      %p353 = scmp.eq.s32.totalorder %s37, 1
      %p354 = por %p352, %p353
      %p356 = scmp.ne.s32.totalorder %s341, %s355
      %p357 = scmp.eq.s32.totalorder %s37, 0
      %p358 = por %p356, %p357
      %s359 = ssub.s32 %s31, %s38
      %p360 = scmp.eq.s32.totalorder %s359, 0
      %s362 = sadd.s32 %s361, 1
      %s363 = scalar_select %p360, %s361, %s362
      %p366 = pneg %p360
      %p367 = scmp.eq.s32.totalorder %s31, 1
      %p368 = por %p366, %p367
      %p369 = scmp.ne.s32.totalorder %s361, %s364
      %p370 = scmp.eq.s32.totalorder %s31, 0
      %p371 = por %p369, %p370
      %p372 = scmp.ne.s32.totalorder %s361, %s364
      %p373 = scmp.eq.s32.totalorder %s36, 1
      %p374 = por %p372, %p373
      %p375 = scmp.ne.s32.totalorder %s364, %s365
      %p376 = scmp.eq.s32.totalorder %s36, 0
      %p377 = por %p375, %p376
      %p378 = scmp.ne.s32.totalorder %s364, %s365
      %p379 = scmp.eq.s32.totalorder %s37, 1
      %p380 = por %p378, %p379
      %p382 = scmp.ne.s32.totalorder %s365, %s381
      %p383 = scmp.eq.s32.totalorder %s37, 0
      %p384 = por %p382, %p383
      %p385 = scmp.le.s32.totalorder 1, %s31
      %p386 = scmp.lt.s32.totalorder %s31, 3
      %p387 = pnand %p385, %p386
      %p388 = pneg %p387
      // Predicated region
      $region9: #{tpu_custom_call.1} parent=5 // pred_check
        _
      $region10: #{tpu_custom_call.1} parent=5 // pred_check_branch
        %390 = sbr.rel (%p387) target = $region12
      $region11: #{tpu_custom_call.1} parent=5 // pred_region
        %s391 = ssub.s32 %s31, 1
        // Predicated region
        $region13: #{tpu_custom_call.1} parent=11 // pred_check
          %p392 = pneg %p78
        $region14: #{tpu_custom_call.1} parent=11 // pred_check_branch
          %394 = sbr.rel (%p392) target = $region16
        $region15: #{tpu_custom_call.1} parent=11 // pred_region
          %s396 = ssub.s32 2048, 2048
          %397 = vsyncadd [#allocation6], %s396
          %s398 = sshll.u32 [#allocation5], 4
          %s399 = int_to_ptr.vmem [resolvable:$true] %s398
          %404 = dma.hbm_to_vmem [thread:$0]  %s1, 2048, %s399, [#allocation6], 128, 128, 8
        $region16: #{tpu_custom_call.1} parent=11 // pred_fallthru
          _
        // Predicated region
        $region17: #{tpu_custom_call.1} parent=11 // pred_check
          %p405 = pneg %p99
        $region18: #{tpu_custom_call.1} parent=11 // pred_check_branch
          %407 = sbr.rel (%p405) target = $region20
        $region19: #{tpu_custom_call.1} parent=11 // pred_region
          _
        $region20: #{tpu_custom_call.1} parent=11 // pred_fallthru
          _
        // Predicated region
        $region21: #{tpu_custom_call.1} parent=11 // pred_check
          %p408 = pneg %p120
        $region22: #{tpu_custom_call.1} parent=11 // pred_check_branch
          %410 = sbr.rel (%p408) target = $region24
        $region23: #{tpu_custom_call.1} parent=11 // pred_region
          %s412 = ssub.s32 2048, 2048
          %413 = vsyncadd [#allocation6], %s412
          %s414 = sshll.u32 [#allocation7], 4
          %s415 = int_to_ptr.vmem [resolvable:$true] %s414
          %420 = dma.hbm_to_vmem [thread:$0]  %s3, 2048, %s415, [#allocation6], 128, 128, 8
        $region24: #{tpu_custom_call.1} parent=11 // pred_fallthru
          _
        // Predicated region
        $region25: #{tpu_custom_call.1} parent=11 // pred_check
          %p421 = pneg %p141
        $region26: #{tpu_custom_call.1} parent=11 // pred_check_branch
          %423 = sbr.rel (%p421) target = $region28
        $region27: #{tpu_custom_call.1} parent=11 // pred_region
          _
        $region28: #{tpu_custom_call.1} parent=11 // pred_fallthru
          _
        // Predicated region
        $region29: #{tpu_custom_call.1} parent=11 // pred_check
          %p424 = pneg %p162
        $region30: #{tpu_custom_call.1} parent=11 // pred_check_branch
          %426 = sbr.rel (%p424) target = $region32
        $region31: #{tpu_custom_call.1} parent=11 // pred_region
          %s428 = ssub.s32 2048, 2048
          %429 = vsyncadd [#allocation9], %s428
          %s430 = sshll.u32 [#allocation8], 4
          %s431 = int_to_ptr.vmem [resolvable:$true] %s430
          %436 = dma.hbm_to_vmem [thread:$0]  %s5, 2048, %s431, [#allocation9], 128, 128, 8
        $region32: #{tpu_custom_call.1} parent=11 // pred_fallthru
          _
        // Predicated region
        $region33: #{tpu_custom_call.1} parent=11 // pred_check
          %p437 = pneg %p183
        $region34: #{tpu_custom_call.1} parent=11 // pred_check_branch
          %439 = sbr.rel (%p437) target = $region36
        $region35: #{tpu_custom_call.1} parent=11 // pred_region
          _
        $region36: #{tpu_custom_call.1} parent=11 // pred_fallthru
          _
        // Predicated region
        $region37: #{tpu_custom_call.1} parent=11 // pred_check
          %p440 = pneg %p204
        $region38: #{tpu_custom_call.1} parent=11 // pred_check_branch
          %442 = sbr.rel (%p440) target = $region40
        $region39: #{tpu_custom_call.1} parent=11 // pred_region
          %s444 = ssub.s32 4096, 4096
          %445 = vsyncadd [#allocation9], %s444
          %s446 = sshll.u32 [#allocation10], 4
          %s447 = int_to_ptr.vmem [resolvable:$true] %s446
          %452 = dma.hbm_to_vmem [thread:$0]  %s7, 4096, %s447, [#allocation9], 256, 256, 16
        $region40: #{tpu_custom_call.1} parent=11 // pred_fallthru
          _
        // Predicated region
        $region41: #{tpu_custom_call.1} parent=11 // pred_check
          %p453 = pneg %p225
        $region42: #{tpu_custom_call.1} parent=11 // pred_check_branch
          %455 = sbr.rel (%p453) target = $region44
        $region43: #{tpu_custom_call.1} parent=11 // pred_region
          _
        $region44: #{tpu_custom_call.1} parent=11 // pred_fallthru
          _
        // Predicated region
        $region45: #{tpu_custom_call.1} parent=11 // pred_check
          %p456 = pneg %p246
        $region46: #{tpu_custom_call.1} parent=11 // pred_check_branch
          %458 = sbr.rel (%p456) target = $region48
        $region47: #{tpu_custom_call.1} parent=11 // pred_region
          %s460 = ssub.s32 8192, 8192
          %461 = vsyncadd [#allocation12], %s460
          %s462 = sshll.u32 [#allocation11], 4
          %s463 = int_to_ptr.vmem [resolvable:$true] %s462
          %468 = dma.hbm_to_vmem [thread:$0]  %s9, 8192, %s463, [#allocation12], 256, 256, 16
        $region48: #{tpu_custom_call.1} parent=11 // pred_fallthru
          _
        // Predicated region
        $region49: #{tpu_custom_call.1} parent=11 // pred_check
          %p469 = pneg %p267
        $region50: #{tpu_custom_call.1} parent=11 // pred_check_branch
          %471 = sbr.rel (%p469) target = $region52
        $region51: #{tpu_custom_call.1} parent=11 // pred_region
          _
        $region52: #{tpu_custom_call.1} parent=11 // pred_fallthru
          _
        // Predicated region
        $region53: #{tpu_custom_call.1} parent=11 // pred_check
          %p472 = pneg %p288
        $region54: #{tpu_custom_call.1} parent=11 // pred_check_branch
          %474 = sbr.rel (%p472) target = $region56
        $region55: #{tpu_custom_call.1} parent=11 // pred_region
          %s476 = ssub.s32 8192, 8192
          %477 = vsyncadd [#allocation12], %s476
          %s478 = sshll.u32 [#allocation13], 4
          %s479 = int_to_ptr.vmem [resolvable:$true] %s478
          %484 = dma.hbm_to_vmem [thread:$0]  %s11, 8192, %s479, [#allocation12], 256, 256, 16
        $region56: #{tpu_custom_call.1} parent=11 // pred_fallthru
          _
        // Predicated region
        $region57: #{tpu_custom_call.1} parent=11 // pred_check
          %p485 = pneg %p309
        $region58: #{tpu_custom_call.1} parent=11 // pred_check_branch
          %487 = sbr.rel (%p485) target = $region60
        $region59: #{tpu_custom_call.1} parent=11 // pred_region
          _
        $region60: #{tpu_custom_call.1} parent=11 // pred_fallthru
          _
        // Predicated region
        $region61: #{tpu_custom_call.1} parent=11 // pred_check
          %p488 = pneg %p330
        $region62: #{tpu_custom_call.1} parent=11 // pred_check_branch
          %490 = sbr.rel (%p488) target = $region64
        $region63: #{tpu_custom_call.1} parent=11 // pred_region
          %s492 = ssub.s32 4096, 4096
          %493 = vsyncadd [#allocation15], %s492
          %s494 = sshll.u32 [#allocation14], 4
          %s495 = int_to_ptr.vmem [resolvable:$true] %s494
          %500 = dma.hbm_to_vmem [thread:$0]  %s13, 4096, %s495, [#allocation15], 128, 128, 8
        $region64: #{tpu_custom_call.1} parent=11 // pred_fallthru
          _
        // Predicated region
        $region65: #{tpu_custom_call.1} parent=11 // pred_check
          %p501 = pneg %p351
        $region66: #{tpu_custom_call.1} parent=11 // pred_check_branch
          %503 = sbr.rel (%p501) target = $region68
        $region67: #{tpu_custom_call.1} parent=11 // pred_region
          _
        $region68: #{tpu_custom_call.1} parent=11 // pred_fallthru
          _
      $region12: #{tpu_custom_call.1} parent=5 // pred_fallthru
        _
      %p504 = scmp.lt.s32.totalorder %s31, 2
      // Predicated region
      $region69: #{tpu_custom_call.1} parent=5 // pred_check
        %p505 = pneg %p504
      $region70: #{tpu_custom_call.1} parent=5 // pred_check_branch
        %507 = sbr.rel (%p505) target = $region72
      $region71: #{tpu_custom_call.1} parent=5 // pred_region
        // Predicated region
        $region73: #{tpu_custom_call.1} parent=71 // pred_check
          %p508 = pneg %p51
        $region74: #{tpu_custom_call.1} parent=71 // pred_check_branch
          %510 = sbr.rel (%p508) target = $region76
        $region75: #{tpu_custom_call.1} parent=71 // pred_region
          %s511 = sand.u32 %s41, 1
          %s512 = scalar_lea.sflag [#allocation3], %s511
          %s513 = sand.u32 %s41, 1
          %s514 = smul.addr %s513, 24
          %s515 = scalar_lea.vmem [#allocation2], %s514
          %s516 = smul.u32 3, %s31
          %s518 = ssub.s32 384, 384
          %519 = vsyncadd %s512, %s518
          %s520 = smul.addr %s516, 128
          %s521 = scalar_lea.hbm %s0, %s520
          %s522 = sshll.u32 %s515, 4
          %s523 = int_to_ptr.vmem [resolvable:$true] %s522
          %528 = dma.hbm_to_vmem [thread:$0]  %s521, 384, %s523, %s512, 128, 128, 8
        $region76: #{tpu_custom_call.1} parent=71 // pred_fallthru
          _
      $region72: #{tpu_custom_call.1} parent=5 // pred_fallthru
        _
      %p529 = scmp.le.s32.totalorder 1, %s31
      %p530 = scmp.lt.s32.totalorder %s31, 3
      %p531 = pnand %p529, %p530
      %p532 = pneg %p531
      // Predicated region
      $region77: #{tpu_custom_call.1} parent=5 // pred_check
        _
      $region78: #{tpu_custom_call.1} parent=5 // pred_check_branch
        %534 = sbr.rel (%p531) target = $region80
      $region79: #{tpu_custom_call.1} parent=5 // pred_region
        %s535 = ssub.s32 %s31, 1
        %s536 = sand.u32 %s44, 1
        %s537 = scalar_lea.sflag [#allocation3], %s536
        %s538 = sand.u32 %s44, 1
        %s539 = smul.addr %s538, 24
        %s540 = scalar_lea.vmem [#allocation2], %s539
        // Predicated region
        $region81: #{tpu_custom_call.1} parent=79 // pred_check
          %p541 = pneg %p57
        $region82: #{tpu_custom_call.1} parent=79 // pred_check_branch
          %543 = sbr.rel (%p541) target = $region84
        $region83: #{tpu_custom_call.1} parent=79 // pred_region
          %544 = dma.done %s537, 384
        $region84: #{tpu_custom_call.1} parent=79 // pred_fallthru
          _
        // Predicated region
        $region85: #{tpu_custom_call.1} parent=79 // pred_check
          %p545 = pneg %p78
        $region86: #{tpu_custom_call.1} parent=79 // pred_check_branch
          %547 = sbr.rel (%p545) target = $region88
        $region87: #{tpu_custom_call.1} parent=79 // pred_region
          %548 = dma.done [#allocation6], 2048
        $region88: #{tpu_custom_call.1} parent=79 // pred_fallthru
          _
        // Predicated region
        $region89: #{tpu_custom_call.1} parent=79 // pred_check
          %p549 = pneg %p120
        $region90: #{tpu_custom_call.1} parent=79 // pred_check_branch
          %551 = sbr.rel (%p549) target = $region92
        $region91: #{tpu_custom_call.1} parent=79 // pred_region
          %552 = dma.done [#allocation6], 2048
        $region92: #{tpu_custom_call.1} parent=79 // pred_fallthru
          _
        // Predicated region
        $region93: #{tpu_custom_call.1} parent=79 // pred_check
          %p553 = pneg %p162
        $region94: #{tpu_custom_call.1} parent=79 // pred_check_branch
          %555 = sbr.rel (%p553) target = $region96
        $region95: #{tpu_custom_call.1} parent=79 // pred_region
          %556 = dma.done [#allocation9], 2048
        $region96: #{tpu_custom_call.1} parent=79 // pred_fallthru
          _
        // Predicated region
        $region97: #{tpu_custom_call.1} parent=79 // pred_check
          %p557 = pneg %p204
        $region98: #{tpu_custom_call.1} parent=79 // pred_check_branch
          %559 = sbr.rel (%p557) target = $region100
        $region99: #{tpu_custom_call.1} parent=79 // pred_region
          %560 = dma.done [#allocation9], 4096
        $region100: #{tpu_custom_call.1} parent=79 // pred_fallthru
          _
        // Predicated region
        $region101: #{tpu_custom_call.1} parent=79 // pred_check
          %p561 = pneg %p246
        $region102: #{tpu_custom_call.1} parent=79 // pred_check_branch
          %563 = sbr.rel (%p561) target = $region104
        $region103: #{tpu_custom_call.1} parent=79 // pred_region
          %564 = dma.done [#allocation12], 8192
        $region104: #{tpu_custom_call.1} parent=79 // pred_fallthru
          _
        // Predicated region
        $region105: #{tpu_custom_call.1} parent=79 // pred_check
          %p565 = pneg %p288
        $region106: #{tpu_custom_call.1} parent=79 // pred_check_branch
          %567 = sbr.rel (%p565) target = $region108
        $region107: #{tpu_custom_call.1} parent=79 // pred_region
          %568 = dma.done [#allocation12], 8192
        $region108: #{tpu_custom_call.1} parent=79 // pred_fallthru
          _
        // Predicated region
        $region109: #{tpu_custom_call.1} parent=79 // pred_check
          %p569 = pneg %p330
        $region110: #{tpu_custom_call.1} parent=79 // pred_check_branch
          %571 = sbr.rel (%p569) target = $region112
        $region111: #{tpu_custom_call.1} parent=79 // pred_region
          %572 = dma.done [#allocation15], 4096
        $region112: #{tpu_custom_call.1} parent=79 // pred_fallthru
          _
        %s573 = sand.u32 %s44, 1
        %s574 = scalar_lea.sflag [#allocation3], %s573
        %s575 = sand.u32 %s44, 1
        %s576 = smul.addr %s575, 24
        %s577 = scalar_lea.vmem [#allocation2], %s576
        %p578 = pneg %p57
        %p579 = pneg %p54
        %p580 = pneg %p78
        %p581 = pneg %p75
        %p582 = pneg %p99
        %p583 = pneg %p96
        %p584 = pneg %p120
        %p585 = pneg %p117
        %p586 = pneg %p141
        %p587 = pneg %p138
        %p588 = pneg %p162
        %p589 = pneg %p159
        %p590 = pneg %p183
        %p591 = pneg %p180
        %p592 = pneg %p204
        %p593 = pneg %p201
        %p594 = pneg %p225
        %p595 = pneg %p222
        %p596 = pneg %p246
        %p597 = pneg %p243
        %p598 = pneg %p267
        %p599 = pneg %p264
        %p600 = pneg %p288
        %p601 = pneg %p285
        %p602 = pneg %p309
        %p603 = pneg %p306
        %p604 = pneg %p330
        %p605 = pneg %p327
        %p606 = pneg %p351
        %p607 = pneg %p348
        %p608 = pneg %p377
        %p609 = pneg %p374
        %s610 = sand.u32 %s364, 1
        %s611 = scalar_lea.sflag [#allocation4], %s610
        %s612 = sand.u32 %s364, 1
        %s613 = smul.addr %s612, 24
        %s614 = scalar_lea.vmem [#allocation16], %s613
        %s615 = smul.u32 3, %s36
        %s616 = smul.u32 3, %s36
        %v617 = vld [vmem:[%s540] sm:$0xff]
        %v618 = vld [vmem:[%s540 + $0x8] sm:$0xff]
        %v619 = vld [vmem:[%s540 + $0x10] sm:$0xff]
        %v620 = vld [vmem:[#allocation5] sm:$0xff]
        %v621 = vld [vmem:[#allocation5 + $0x8] sm:$0xff]
        %v622 = vld [vmem:[#allocation5 + $0x10] sm:$0xff]
        %v623 = vld [vmem:[#allocation5 + $0x18] sm:$0xff]
        %v624 = vld [vmem:[#allocation5 + $0x20] sm:$0xff]
        %v625 = vld [vmem:[#allocation5 + $0x28] sm:$0xff]
        %v626 = vld [vmem:[#allocation5 + $0x30] sm:$0xff]
        %v627 = vld [vmem:[#allocation5 + $0x38] sm:$0xff]
        %v628 = vld [vmem:[#allocation5 + $0x40] sm:$0xff]
        %v629 = vld [vmem:[#allocation5 + $0x48] sm:$0xff]
        %v630 = vld [vmem:[#allocation5 + $0x50] sm:$0xff]
        %v631 = vld [vmem:[#allocation5 + $0x58] sm:$0xff]
        %v632 = vld [vmem:[#allocation5 + $0x60] sm:$0xff]
        %v633 = vld [vmem:[#allocation5 + $0x68] sm:$0xff]
        %v634 = vld [vmem:[#allocation5 + $0x70] sm:$0xff]
        %v635 = vld [vmem:[#allocation5 + $0x78] sm:$0xff]
        %v636 = vld [vmem:[%s2] sm:$0x1]
        %v638 = vlaneseq
        %v639 = vshrl.u32 %v638, 7
        %v640 = vsub.s32 0, %v639
        %v641 = vrot.slane %v636, %v640
        %643 = vmatprep.subr.mxu0 0.0
        %644 = vmatpush1.msra.mxu0 %v620
        %645 = vmatprep.subr.mxu0 0.0
        %646 = vmatpush1.msra.mxu0 %v621
        %647 = vmatprep.subr.mxu0 0.0
        %648 = vmatpush1.msra.mxu0 %v622
        %649 = vmatprep.subr.mxu0 0.0
        %650 = vmatpush1.msra.mxu0 %v623
        %651 = vmatprep.subr.mxu0 0.0
        %652 = vmatpush1.msra.mxu0 %v624
        %653 = vmatprep.subr.mxu0 0.0
        %654 = vmatpush1.msra.mxu0 %v625
        %655 = vmatprep.subr.mxu0 0.0
        %656 = vmatpush1.msra.mxu0 %v626
        %657 = vmatprep.subr.mxu0 0.0
        %658 = vmatpush1.msra.mxu0 %v627
        %659 = vmatprep.subr.mxu0 0.0
        %660 = vmatpush1.msra.mxu0 %v628
        %661 = vmatprep.subr.mxu0 0.0
        %662 = vmatpush1.msra.mxu0 %v629
        %663 = vmatprep.subr.mxu0 0.0
        %664 = vmatpush1.msra.mxu0 %v630
        %665 = vmatprep.subr.mxu0 0.0
        %666 = vmatpush1.msra.mxu0 %v631
        %667 = vmatprep.subr.mxu0 0.0
        %668 = vmatpush1.msra.mxu0 %v632
        %669 = vmatprep.subr.mxu0 0.0
        %670 = vmatpush1.msra.mxu0 %v633
        %671 = vmatprep.subr.mxu0 0.0
        %672 = vmatpush1.msra.mxu0 %v634
        %673 = vmatprep.subr.mxu0 0.0
        %674 = vmatpush1.msra.mxu0 %v635
        %675 = vmatprep.subr.mxu0 0.0
        %676 = vmatpush1.msra.mxu0 0.0
        %677 = vmatprep.subr.mxu0 0.0
        %678 = vmatpush1.msra.mxu0 0.0
        %679 = vmatprep.subr.mxu0 0.0
        %680 = vmatpush1.msra.mxu0 0.0
        %681 = vmatprep.subr.mxu0 0.0
        %682 = vmatpush1.msra.mxu0 0.0
        %683 = vmatprep.subr.mxu0 0.0
        %684 = vmatpush1.msra.mxu0 0.0
        %685 = vmatprep.subr.mxu0 0.0
        %686 = vmatpush1.msra.mxu0 0.0
        %687 = vmatprep.subr.mxu0 0.0
        %688 = vmatpush1.msra.mxu0 0.0
        %689 = vmatprep.subr.mxu0 0.0
        %690 = vmatpush1.msra.mxu0 0.0
        %691 = vmatprep.subr.mxu0 0.0
        %692 = vmatpush1.msra.mxu0 0.0
        %693 = vmatprep.subr.mxu0 0.0
        %694 = vmatpush1.msra.mxu0 0.0
        %695 = vmatprep.subr.mxu0 0.0
        %696 = vmatpush1.msra.mxu0 0.0
        %697 = vmatprep.subr.mxu0 0.0
        %698 = vmatpush1.msra.mxu0 0.0
        %699 = vmatprep.subr.mxu0 0.0
        %700 = vmatpush1.msra.mxu0 0.0
        %701 = vmatprep.subr.mxu0 0.0
        %702 = vmatpush1.msra.mxu0 0.0
        %703 = vmatprep.subr.mxu0 0.0
        %704 = vmatpush1.msra.mxu0 0.0
        %705 = vmatprep.subr.mxu0 0.0
        %706 = vmatpush1.msra.mxu0 0.0
        %707 = vmatprep.mubr.f32.mxu0 0.0
        %708 = vmatmul.mubr.f32.gmra.mrb[0].mxu0 %v617
        %v709 = vpop.f32.mrb[0].mxu0
        %v710 = vadd.f32 %v641, %v709
        %v711 = vpop.f32.mrb[0].mxu0
        %712 = vmatprep.mubr.f32.mxu0 0.0
        %713 = vmatmul.mubr.f32.gmra.mrb[0].mxu0 %v618
        %v714 = vpop.f32.mrb[0].mxu0
        %v715 = vadd.f32 %v641, %v714
        %v716 = vpop.f32.mrb[0].mxu0
        %717 = vmatprep.mubr.f32.mxu0 0.0
        %718 = vmatmul.mubr.f32.gmra.mrb[0].mxu0 %v619
        %v719 = vpop.f32.mrb[0].mxu0
        %v720 = vadd.f32 %v641, %v719
        %v721 = vpop.f32.mrb[0].mxu0
        %722 = vdwg.mxu0
        %v723 = vxor.u32 %v710, 2147483648
        %v724 = vxor.u32 %v715, 2147483648
        %v725 = vxor.u32 %v720, 2147483648
        %v726 = vmul.f32 %v723, 1.442695
        %v727 = vpow.pop %v726
        %v728 = vmul.f32 %v724, 1.442695
        %v729 = vpow.pop %v728
        %v730 = vmul.f32 %v725, 1.442695
        %v731 = vpow.pop %v730
        %v732 = vadd.f32 %v727, 1.0
        %v733 = vadd.f32 %v729, 1.0
        %v734 = vadd.f32 %v731, 1.0
        %v735 = vrcp.pop %v732
        %v736 = vmul.f32 1.0, %v735
        %v737 = vrcp.pop %v733
        %v738 = vmul.f32 1.0, %v737
        %v739 = vrcp.pop %v734
        %v740 = vmul.f32 1.0, %v739
        %v741 = vmul.f32 %v710, %v736
        %v742 = vmul.f32 %v715, %v738
        %v743 = vmul.f32 %v720, %v740
        %v744 = vld [vmem:[#allocation7] sm:$0xff]
        %v745 = vld [vmem:[#allocation7 + $0x8] sm:$0xff]
        %v746 = vld [vmem:[#allocation7 + $0x10] sm:$0xff]
        %v747 = vld [vmem:[#allocation7 + $0x18] sm:$0xff]
        %v748 = vld [vmem:[#allocation7 + $0x20] sm:$0xff]
        %v749 = vld [vmem:[#allocation7 + $0x28] sm:$0xff]
        %v750 = vld [vmem:[#allocation7 + $0x30] sm:$0xff]
        %v751 = vld [vmem:[#allocation7 + $0x38] sm:$0xff]
        %v752 = vld [vmem:[#allocation7 + $0x40] sm:$0xff]
        %v753 = vld [vmem:[#allocation7 + $0x48] sm:$0xff]
        %v754 = vld [vmem:[#allocation7 + $0x50] sm:$0xff]
        %v755 = vld [vmem:[#allocation7 + $0x58] sm:$0xff]
        %v756 = vld [vmem:[#allocation7 + $0x60] sm:$0xff]
        %v757 = vld [vmem:[#allocation7 + $0x68] sm:$0xff]
        %v758 = vld [vmem:[#allocation7 + $0x70] sm:$0xff]
        %v759 = vld [vmem:[#allocation7 + $0x78] sm:$0xff]
        %v760 = vld [vmem:[%s4] sm:$0x1]
        %v762 = vlaneseq
        %v763 = vshrl.u32 %v762, 7
        %v764 = vsub.s32 0, %v763
        %v765 = vrot.slane %v760, %v764
        %767 = vmatprep.subr.mxu0 0.0
        %768 = vmatpush1.msra.mxu0 %v744
        %769 = vmatprep.subr.mxu0 0.0
        %770 = vmatpush1.msra.mxu0 %v745
        %771 = vmatprep.subr.mxu0 0.0
        %772 = vmatpush1.msra.mxu0 %v746
        %773 = vmatprep.subr.mxu0 0.0
        %774 = vmatpush1.msra.mxu0 %v747
        %775 = vmatprep.subr.mxu0 0.0
        %776 = vmatpush1.msra.mxu0 %v748
        %777 = vmatprep.subr.mxu0 0.0
        %778 = vmatpush1.msra.mxu0 %v749
        %779 = vmatprep.subr.mxu0 0.0
        %780 = vmatpush1.msra.mxu0 %v750
        %781 = vmatprep.subr.mxu0 0.0
        %782 = vmatpush1.msra.mxu0 %v751
        %783 = vmatprep.subr.mxu0 0.0
        %784 = vmatpush1.msra.mxu0 %v752
        %785 = vmatprep.subr.mxu0 0.0
        %786 = vmatpush1.msra.mxu0 %v753
        %787 = vmatprep.subr.mxu0 0.0
        %788 = vmatpush1.msra.mxu0 %v754
        %789 = vmatprep.subr.mxu0 0.0
        %790 = vmatpush1.msra.mxu0 %v755
        %791 = vmatprep.subr.mxu0 0.0
        %792 = vmatpush1.msra.mxu0 %v756
        %793 = vmatprep.subr.mxu0 0.0
        %794 = vmatpush1.msra.mxu0 %v757
        %795 = vmatprep.subr.mxu0 0.0
        %796 = vmatpush1.msra.mxu0 %v758
        %797 = vmatprep.subr.mxu0 0.0
        %798 = vmatpush1.msra.mxu0 %v759
        %799 = vmatprep.subr.mxu0 0.0
        %800 = vmatpush1.msra.mxu0 0.0
        %801 = vmatprep.subr.mxu0 0.0
        %802 = vmatpush1.msra.mxu0 0.0
        %803 = vmatprep.subr.mxu0 0.0
        %804 = vmatpush1.msra.mxu0 0.0
        %805 = vmatprep.subr.mxu0 0.0
        %806 = vmatpush1.msra.mxu0 0.0
        %807 = vmatprep.subr.mxu0 0.0
        %808 = vmatpush1.msra.mxu0 0.0
        %809 = vmatprep.subr.mxu0 0.0
        %810 = vmatpush1.msra.mxu0 0.0
        %811 = vmatprep.subr.mxu0 0.0
        %812 = vmatpush1.msra.mxu0 0.0
        %813 = vmatprep.subr.mxu0 0.0
        %814 = vmatpush1.msra.mxu0 0.0
        %815 = vmatprep.subr.mxu0 0.0
        %816 = vmatpush1.msra.mxu0 0.0
        %817 = vmatprep.subr.mxu0 0.0
        %818 = vmatpush1.msra.mxu0 0.0
        %819 = vmatprep.subr.mxu0 0.0
        %820 = vmatpush1.msra.mxu0 0.0
        %821 = vmatprep.subr.mxu0 0.0
        %822 = vmatpush1.msra.mxu0 0.0
        %823 = vmatprep.subr.mxu0 0.0
        %824 = vmatpush1.msra.mxu0 0.0
        %825 = vmatprep.subr.mxu0 0.0
        %826 = vmatpush1.msra.mxu0 0.0
        %827 = vmatprep.subr.mxu0 0.0
        %828 = vmatpush1.msra.mxu0 0.0
        %829 = vmatprep.subr.mxu0 0.0
        %830 = vmatpush1.msra.mxu0 0.0
        %831 = vmatprep.mubr.f32.mxu0 0.0
        %832 = vmatmul.mubr.f32.gmra.mrb[0].mxu0 %v741
        %v833 = vpop.f32.mrb[0].mxu0
        %v834 = vadd.f32 %v765, %v833
        %v835 = vpop.f32.mrb[0].mxu0
        %836 = vmatprep.mubr.f32.mxu0 0.0
        %837 = vmatmul.mubr.f32.gmra.mrb[0].mxu0 %v742
        %v838 = vpop.f32.mrb[0].mxu0
        %v839 = vadd.f32 %v765, %v838
        %v840 = vpop.f32.mrb[0].mxu0
        %841 = vmatprep.mubr.f32.mxu0 0.0
        %842 = vmatmul.mubr.f32.gmra.mrb[0].mxu0 %v743
        %v843 = vpop.f32.mrb[0].mxu0
        %v844 = vadd.f32 %v765, %v843
        %v845 = vpop.f32.mrb[0].mxu0
        %846 = vdwg.mxu0
        %v847 = vxor.u32 %v834, 2147483648
        %v848 = vxor.u32 %v839, 2147483648
        %v849 = vxor.u32 %v844, 2147483648
        %v850 = vmul.f32 %v847, 1.442695
        %v851 = vpow.pop %v850
        %v852 = vmul.f32 %v848, 1.442695
        %v853 = vpow.pop %v852
        %v854 = vmul.f32 %v849, 1.442695
        %v855 = vpow.pop %v854
        %v856 = vadd.f32 %v851, 1.0
        %v857 = vadd.f32 %v853, 1.0
        %v858 = vadd.f32 %v855, 1.0
        %v859 = vrcp.pop %v856
        %v860 = vmul.f32 1.0, %v859
        %v861 = vrcp.pop %v857
        %v862 = vmul.f32 1.0, %v861
        %v863 = vrcp.pop %v858
        %v864 = vmul.f32 1.0, %v863
        %v865 = vmul.f32 %v834, %v860
        %v866 = vmul.f32 %v839, %v862
        %v867 = vmul.f32 %v844, %v864
        %v868 = vld [vmem:[#allocation8] sm:$0xff]
        %v869 = vld [vmem:[#allocation8 + $0x8] sm:$0xff]
        %v870 = vld [vmem:[#allocation8 + $0x10] sm:$0xff]
        %v871 = vld [vmem:[#allocation8 + $0x18] sm:$0xff]
        %v872 = vld [vmem:[#allocation8 + $0x20] sm:$0xff]
        %v873 = vld [vmem:[#allocation8 + $0x28] sm:$0xff]
        %v874 = vld [vmem:[#allocation8 + $0x30] sm:$0xff]
        %v875 = vld [vmem:[#allocation8 + $0x38] sm:$0xff]
        %v876 = vld [vmem:[#allocation8 + $0x40] sm:$0xff]
        %v877 = vld [vmem:[#allocation8 + $0x48] sm:$0xff]
        %v878 = vld [vmem:[#allocation8 + $0x50] sm:$0xff]
        %v879 = vld [vmem:[#allocation8 + $0x58] sm:$0xff]
        %v880 = vld [vmem:[#allocation8 + $0x60] sm:$0xff]
        %v881 = vld [vmem:[#allocation8 + $0x68] sm:$0xff]
        %v882 = vld [vmem:[#allocation8 + $0x70] sm:$0xff]
        %v883 = vld [vmem:[#allocation8 + $0x78] sm:$0xff]
        %v884 = vld [vmem:[%s6] sm:$0x1]
        %v886 = vlaneseq
        %v887 = vshrl.u32 %v886, 7
        %v888 = vsub.s32 0, %v887
        %v889 = vrot.slane %v884, %v888
        %891 = vmatprep.subr.mxu0 0.0
        %892 = vmatpush1.msra.mxu0 %v868
        %893 = vmatprep.subr.mxu0 0.0
        %894 = vmatpush1.msra.mxu0 %v869
        %895 = vmatprep.subr.mxu0 0.0
        %896 = vmatpush1.msra.mxu0 %v870
        %897 = vmatprep.subr.mxu0 0.0
        %898 = vmatpush1.msra.mxu0 %v871
        %899 = vmatprep.subr.mxu0 0.0
        %900 = vmatpush1.msra.mxu0 %v872
        %901 = vmatprep.subr.mxu0 0.0
        %902 = vmatpush1.msra.mxu0 %v873
        %903 = vmatprep.subr.mxu0 0.0
        %904 = vmatpush1.msra.mxu0 %v874
        %905 = vmatprep.subr.mxu0 0.0
        %906 = vmatpush1.msra.mxu0 %v875
        %907 = vmatprep.subr.mxu0 0.0
        %908 = vmatpush1.msra.mxu0 %v876
        %909 = vmatprep.subr.mxu0 0.0
        %910 = vmatpush1.msra.mxu0 %v877
        %911 = vmatprep.subr.mxu0 0.0
        %912 = vmatpush1.msra.mxu0 %v878
        %913 = vmatprep.subr.mxu0 0.0
        %914 = vmatpush1.msra.mxu0 %v879
        %915 = vmatprep.subr.mxu0 0.0
        %916 = vmatpush1.msra.mxu0 %v880
        %917 = vmatprep.subr.mxu0 0.0
        %918 = vmatpush1.msra.mxu0 %v881
        %919 = vmatprep.subr.mxu0 0.0
        %920 = vmatpush1.msra.mxu0 %v882
        %921 = vmatprep.subr.mxu0 0.0
        %922 = vmatpush1.msra.mxu0 %v883
        %923 = vmatprep.subr.mxu0 0.0
        %924 = vmatpush1.msra.mxu0 0.0
        %925 = vmatprep.subr.mxu0 0.0
        %926 = vmatpush1.msra.mxu0 0.0
        %927 = vmatprep.subr.mxu0 0.0
        %928 = vmatpush1.msra.mxu0 0.0
        %929 = vmatprep.subr.mxu0 0.0
        %930 = vmatpush1.msra.mxu0 0.0
        %931 = vmatprep.subr.mxu0 0.0
        %932 = vmatpush1.msra.mxu0 0.0
        %933 = vmatprep.subr.mxu0 0.0
        %934 = vmatpush1.msra.mxu0 0.0
        %935 = vmatprep.subr.mxu0 0.0
        %936 = vmatpush1.msra.mxu0 0.0
        %937 = vmatprep.subr.mxu0 0.0
        %938 = vmatpush1.msra.mxu0 0.0
        %939 = vmatprep.subr.mxu0 0.0
        %940 = vmatpush1.msra.mxu0 0.0
        %941 = vmatprep.subr.mxu0 0.0
        %942 = vmatpush1.msra.mxu0 0.0
        %943 = vmatprep.subr.mxu0 0.0
        %944 = vmatpush1.msra.mxu0 0.0
        %945 = vmatprep.subr.mxu0 0.0
        %946 = vmatpush1.msra.mxu0 0.0
        %947 = vmatprep.subr.mxu0 0.0
        %948 = vmatpush1.msra.mxu0 0.0
        %949 = vmatprep.subr.mxu0 0.0
        %950 = vmatpush1.msra.mxu0 0.0
        %951 = vmatprep.subr.mxu0 0.0
        %952 = vmatpush1.msra.mxu0 0.0
        %953 = vmatprep.subr.mxu0 0.0
        %954 = vmatpush1.msra.mxu0 0.0
        %955 = vmatprep.mubr.f32.mxu0 0.0
        %956 = vmatmul.mubr.f32.gmra.mrb[0].mxu0 %v865
        %v957 = vpop.f32.mrb[0].mxu0
        %v958 = vadd.f32 %v889, %v957
        %v959 = vpop.f32.mrb[0].mxu0
        %960 = vmatprep.mubr.f32.mxu0 0.0
        %961 = vmatmul.mubr.f32.gmra.mrb[0].mxu0 %v866
        %v962 = vpop.f32.mrb[0].mxu0
        %v963 = vadd.f32 %v889, %v962
        %v964 = vpop.f32.mrb[0].mxu0
        %965 = vmatprep.mubr.f32.mxu0 0.0
        %966 = vmatmul.mubr.f32.gmra.mrb[0].mxu0 %v867
        %v967 = vpop.f32.mrb[0].mxu0
        %v968 = vadd.f32 %v889, %v967
        %v969 = vpop.f32.mrb[0].mxu0
        %970 = vdwg.mxu0
        %v971 = vld [vmem:[#allocation10] sm:$0xff]
        %v972 = vld [vmem:[#allocation10 + $0x8] sm:$0xff]
        %v973 = vld [vmem:[#allocation10 + $0x10] sm:$0xff]
        %v974 = vld [vmem:[#allocation10 + $0x18] sm:$0xff]
        %v975 = vld [vmem:[#allocation10 + $0x20] sm:$0xff]
        %v976 = vld [vmem:[#allocation10 + $0x28] sm:$0xff]
        %v977 = vld [vmem:[#allocation10 + $0x30] sm:$0xff]
        %v978 = vld [vmem:[#allocation10 + $0x38] sm:$0xff]
        %v979 = vld [vmem:[#allocation10 + $0x40] sm:$0xff]
        %v980 = vld [vmem:[#allocation10 + $0x48] sm:$0xff]
        %v981 = vld [vmem:[#allocation10 + $0x50] sm:$0xff]
        %v982 = vld [vmem:[#allocation10 + $0x58] sm:$0xff]
        %v983 = vld [vmem:[#allocation10 + $0x60] sm:$0xff]
        %v984 = vld [vmem:[#allocation10 + $0x68] sm:$0xff]
        %v985 = vld [vmem:[#allocation10 + $0x70] sm:$0xff]
        %v986 = vld [vmem:[#allocation10 + $0x78] sm:$0xff]
        %v987 = vld [vmem:[#allocation10 + $0x80] sm:$0xff]
        %v988 = vld [vmem:[#allocation10 + $0x88] sm:$0xff]
        %v989 = vld [vmem:[#allocation10 + $0x90] sm:$0xff]
        %v990 = vld [vmem:[#allocation10 + $0x98] sm:$0xff]
        %v991 = vld [vmem:[#allocation10 + $0xa0] sm:$0xff]
        %v992 = vld [vmem:[#allocation10 + $0xa8] sm:$0xff]
        %v993 = vld [vmem:[#allocation10 + $0xb0] sm:$0xff]
        %v994 = vld [vmem:[#allocation10 + $0xb8] sm:$0xff]
        %v995 = vld [vmem:[#allocation10 + $0xc0] sm:$0xff]
        %v996 = vld [vmem:[#allocation10 + $0xc8] sm:$0xff]
        %v997 = vld [vmem:[#allocation10 + $0xd0] sm:$0xff]
        %v998 = vld [vmem:[#allocation10 + $0xd8] sm:$0xff]
        %v999 = vld [vmem:[#allocation10 + $0xe0] sm:$0xff]
        %v1000 = vld [vmem:[#allocation10 + $0xe8] sm:$0xff]
        %v1001 = vld [vmem:[#allocation10 + $0xf0] sm:$0xff]
        %v1002 = vld [vmem:[#allocation10 + $0xf8] sm:$0xff]
        %v1003 = vld [vmem:[%s8] sm:$0x3]
        %v1005 = vlaneseq
        %v1006 = vshrl.u32 %v1005, 7
        %v1007 = vsub.s32 0, %v1006
        %v1008 = vrot.slane %v1003, %v1007
        %v1009 = vlaneseq
        %v1010 = vshrl.u32 %v1009, 7
        %v1011 = vsub.s32 1, %v1010
        %v1012 = vrot.slane %v1003, %v1011
        %1015 = vmatprep.subr.mxu0 %v972
        %1016 = vmatpush1.msra.mxu0 %v971
        %1017 = vmatprep.subr.mxu0 %v974
        %1018 = vmatpush1.msra.mxu0 %v973
        %1019 = vmatprep.subr.mxu0 %v976
        %1020 = vmatpush1.msra.mxu0 %v975
        %1021 = vmatprep.subr.mxu0 %v978
        %1022 = vmatpush1.msra.mxu0 %v977
        %1023 = vmatprep.subr.mxu0 %v980
        %1024 = vmatpush1.msra.mxu0 %v979
        %1025 = vmatprep.subr.mxu0 %v982
        %1026 = vmatpush1.msra.mxu0 %v981
        %1027 = vmatprep.subr.mxu0 %v984
        %1028 = vmatpush1.msra.mxu0 %v983
        %1029 = vmatprep.subr.mxu0 %v986
        %1030 = vmatpush1.msra.mxu0 %v985
        %1031 = vmatprep.subr.mxu0 %v988
        %1032 = vmatpush1.msra.mxu0 %v987
        %1033 = vmatprep.subr.mxu0 %v990
        %1034 = vmatpush1.msra.mxu0 %v989
        %1035 = vmatprep.subr.mxu0 %v992
        %1036 = vmatpush1.msra.mxu0 %v991
        %1037 = vmatprep.subr.mxu0 %v994
        %1038 = vmatpush1.msra.mxu0 %v993
        %1039 = vmatprep.subr.mxu0 %v996
        %1040 = vmatpush1.msra.mxu0 %v995
        %1041 = vmatprep.subr.mxu0 %v998
        %1042 = vmatpush1.msra.mxu0 %v997
        %1043 = vmatprep.subr.mxu0 %v1000
        %1044 = vmatpush1.msra.mxu0 %v999
        %1045 = vmatprep.subr.mxu0 %v1002
        %1046 = vmatpush1.msra.mxu0 %v1001
        %1047 = vmatprep.subr.mxu0 0.0
        %1048 = vmatpush1.msra.mxu0 0.0
        %1049 = vmatprep.subr.mxu0 0.0
        %1050 = vmatpush1.msra.mxu0 0.0
        %1051 = vmatprep.subr.mxu0 0.0
        %1052 = vmatpush1.msra.mxu0 0.0
        %1053 = vmatprep.subr.mxu0 0.0
        %1054 = vmatpush1.msra.mxu0 0.0
        %1055 = vmatprep.subr.mxu0 0.0
        %1056 = vmatpush1.msra.mxu0 0.0
        %1057 = vmatprep.subr.mxu0 0.0
        %1058 = vmatpush1.msra.mxu0 0.0
        %1059 = vmatprep.subr.mxu0 0.0
        %1060 = vmatpush1.msra.mxu0 0.0
        %1061 = vmatprep.subr.mxu0 0.0
        %1062 = vmatpush1.msra.mxu0 0.0
        %1063 = vmatprep.subr.mxu0 0.0
        %1064 = vmatpush1.msra.mxu0 0.0
        %1065 = vmatprep.subr.mxu0 0.0
        %1066 = vmatpush1.msra.mxu0 0.0
        %1067 = vmatprep.subr.mxu0 0.0
        %1068 = vmatpush1.msra.mxu0 0.0
        %1069 = vmatprep.subr.mxu0 0.0
        %1070 = vmatpush1.msra.mxu0 0.0
        %1071 = vmatprep.subr.mxu0 0.0
        %1072 = vmatpush1.msra.mxu0 0.0
        %1073 = vmatprep.subr.mxu0 0.0
        %1074 = vmatpush1.msra.mxu0 0.0
        %1075 = vmatprep.subr.mxu0 0.0
        %1076 = vmatpush1.msra.mxu0 0.0
        %1077 = vmatprep.subr.mxu0 0.0
        %1078 = vmatpush1.msra.mxu0 0.0
        %1079 = vmatprep.mubr.f32.mxu0 0.0
        %1080 = vmatmul.mubr.f32.gmra.mrb[0].mxu0 %v617
        %v1081 = vpop.f32.mrb[0].mxu0
        %v1082 = vadd.f32 %v1008, %v1081
        %v1083 = vpop.f32.mrb[0].mxu0
        %v1084 = vadd.f32 %v1012, %v1083
        %1085 = vmatprep.mubr.f32.mxu0 0.0
        %1086 = vmatmul.mubr.f32.gmra.mrb[0].mxu0 %v618
        %v1087 = vpop.f32.mrb[0].mxu0
        %v1088 = vadd.f32 %v1008, %v1087
        %v1089 = vpop.f32.mrb[0].mxu0
        %v1090 = vadd.f32 %v1012, %v1089
        %1091 = vmatprep.mubr.f32.mxu0 0.0
        %1092 = vmatmul.mubr.f32.gmra.mrb[0].mxu0 %v619
        %v1093 = vpop.f32.mrb[0].mxu0
        %v1094 = vadd.f32 %v1008, %v1093
        %v1095 = vpop.f32.mrb[0].mxu0
        %v1096 = vadd.f32 %v1012, %v1095
        %1097 = vdwg.mxu0
        %v1098 = vxor.u32 %v1082, 2147483648
        %v1099 = vxor.u32 %v1084, 2147483648
        %v1100 = vxor.u32 %v1088, 2147483648
        %v1101 = vxor.u32 %v1090, 2147483648
        %v1102 = vxor.u32 %v1094, 2147483648
        %v1103 = vxor.u32 %v1096, 2147483648
        %v1104 = vmul.f32 %v1098, 1.442695
        %v1105 = vpow.pop %v1104
        %v1106 = vmul.f32 %v1099, 1.442695
        %v1107 = vpow.pop %v1106
        %v1108 = vmul.f32 %v1100, 1.442695
        %v1109 = vpow.pop %v1108
        %v1110 = vmul.f32 %v1101, 1.442695
        %v1111 = vpow.pop %v1110
        %v1112 = vmul.f32 %v1102, 1.442695
        %v1113 = vpow.pop %v1112
        %v1114 = vmul.f32 %v1103, 1.442695
        %v1115 = vpow.pop %v1114
        %v1116 = vadd.f32 %v1105, 1.0
        %v1117 = vadd.f32 %v1107, 1.0
        %v1118 = vadd.f32 %v1109, 1.0
        %v1119 = vadd.f32 %v1111, 1.0
        %v1120 = vadd.f32 %v1113, 1.0
        %v1121 = vadd.f32 %v1115, 1.0
        %v1122 = vrcp.pop %v1116
        %v1123 = vmul.f32 1.0, %v1122
        %v1124 = vrcp.pop %v1117
        %v1125 = vmul.f32 1.0, %v1124
        %v1126 = vrcp.pop %v1118
        %v1127 = vmul.f32 1.0, %v1126
        %v1128 = vrcp.pop %v1119
        %v1129 = vmul.f32 1.0, %v1128
        %v1130 = vrcp.pop %v1120
        %v1131 = vmul.f32 1.0, %v1130
        %v1132 = vrcp.pop %v1121
        %v1133 = vmul.f32 1.0, %v1132
        %v1134 = vmul.f32 %v1082, %v1123
        %v1135 = vmul.f32 %v1084, %v1125
        %v1136 = vmul.f32 %v1088, %v1127
        %v1137 = vmul.f32 %v1090, %v1129
        %v1138 = vmul.f32 %v1094, %v1131
        %v1139 = vmul.f32 %v1096, %v1133
        %v1140 = vld [vmem:[#allocation11] sm:$0xff]
        %v1141 = vld [vmem:[#allocation11 + $0x8] sm:$0xff]
        %v1142 = vld [vmem:[#allocation11 + $0x10] sm:$0xff]
        %v1143 = vld [vmem:[#allocation11 + $0x18] sm:$0xff]
        %v1144 = vld [vmem:[#allocation11 + $0x20] sm:$0xff]
        %v1145 = vld [vmem:[#allocation11 + $0x28] sm:$0xff]
        %v1146 = vld [vmem:[#allocation11 + $0x30] sm:$0xff]
        %v1147 = vld [vmem:[#allocation11 + $0x38] sm:$0xff]
        %v1148 = vld [vmem:[#allocation11 + $0x40] sm:$0xff]
        %v1149 = vld [vmem:[#allocation11 + $0x48] sm:$0xff]
        %v1150 = vld [vmem:[#allocation11 + $0x50] sm:$0xff]
        %v1151 = vld [vmem:[#allocation11 + $0x58] sm:$0xff]
        %v1152 = vld [vmem:[#allocation11 + $0x60] sm:$0xff]
        %v1153 = vld [vmem:[#allocation11 + $0x68] sm:$0xff]
        %v1154 = vld [vmem:[#allocation11 + $0x70] sm:$0xff]
        %v1155 = vld [vmem:[#allocation11 + $0x78] sm:$0xff]
        %v1156 = vld [vmem:[#allocation11 + $0x80] sm:$0xff]
        %v1157 = vld [vmem:[#allocation11 + $0x88] sm:$0xff]
        %v1158 = vld [vmem:[#allocation11 + $0x90] sm:$0xff]
        %v1159 = vld [vmem:[#allocation11 + $0x98] sm:$0xff]
        %v1160 = vld [vmem:[#allocation11 + $0xa0] sm:$0xff]
        %v1161 = vld [vmem:[#allocation11 + $0xa8] sm:$0xff]
        %v1162 = vld [vmem:[#allocation11 + $0xb0] sm:$0xff]
        %v1163 = vld [vmem:[#allocation11 + $0xb8] sm:$0xff]
        %v1164 = vld [vmem:[#allocation11 + $0xc0] sm:$0xff]
        %v1165 = vld [vmem:[#allocation11 + $0xc8] sm:$0xff]
        %v1166 = vld [vmem:[#allocation11 + $0xd0] sm:$0xff]
        %v1167 = vld [vmem:[#allocation11 + $0xd8] sm:$0xff]
        %v1168 = vld [vmem:[#allocation11 + $0xe0] sm:$0xff]
        %v1169 = vld [vmem:[#allocation11 + $0xe8] sm:$0xff]
        %v1170 = vld [vmem:[#allocation11 + $0xf0] sm:$0xff]
        %v1171 = vld [vmem:[#allocation11 + $0xf8] sm:$0xff]
        %v1172 = vld [vmem:[#allocation11 + $0x100] sm:$0xff]
        %v1173 = vld [vmem:[#allocation11 + $0x108] sm:$0xff]
        %v1174 = vld [vmem:[#allocation11 + $0x110] sm:$0xff]
        %v1175 = vld [vmem:[#allocation11 + $0x118] sm:$0xff]
        %v1176 = vld [vmem:[#allocation11 + $0x120] sm:$0xff]
        %v1177 = vld [vmem:[#allocation11 + $0x128] sm:$0xff]
        %v1178 = vld [vmem:[#allocation11 + $0x130] sm:$0xff]
        %v1179 = vld [vmem:[#allocation11 + $0x138] sm:$0xff]
        %v1180 = vld [vmem:[#allocation11 + $0x140] sm:$0xff]
        %v1181 = vld [vmem:[#allocation11 + $0x148] sm:$0xff]
        %v1182 = vld [vmem:[#allocation11 + $0x150] sm:$0xff]
        %v1183 = vld [vmem:[#allocation11 + $0x158] sm:$0xff]
        %v1184 = vld [vmem:[#allocation11 + $0x160] sm:$0xff]
        %v1185 = vld [vmem:[#allocation11 + $0x168] sm:$0xff]
        %v1186 = vld [vmem:[#allocation11 + $0x170] sm:$0xff]
        %v1187 = vld [vmem:[#allocation11 + $0x178] sm:$0xff]
        %v1188 = vld [vmem:[#allocation11 + $0x180] sm:$0xff]
        %v1189 = vld [vmem:[#allocation11 + $0x188] sm:$0xff]
        %v1190 = vld [vmem:[#allocation11 + $0x190] sm:$0xff]
        %v1191 = vld [vmem:[#allocation11 + $0x198] sm:$0xff]
        %v1192 = vld [vmem:[#allocation11 + $0x1a0] sm:$0xff]
        %v1193 = vld [vmem:[#allocation11 + $0x1a8] sm:$0xff]
        %v1194 = vld [vmem:[#allocation11 + $0x1b0] sm:$0xff]
        %v1195 = vld [vmem:[#allocation11 + $0x1b8] sm:$0xff]
        %v1196 = vld [vmem:[#allocation11 + $0x1c0] sm:$0xff]
        %v1197 = vld [vmem:[#allocation11 + $0x1c8] sm:$0xff]
        %v1198 = vld [vmem:[#allocation11 + $0x1d0] sm:$0xff]
        %v1199 = vld [vmem:[#allocation11 + $0x1d8] sm:$0xff]
        %v1200 = vld [vmem:[#allocation11 + $0x1e0] sm:$0xff]
        %v1201 = vld [vmem:[#allocation11 + $0x1e8] sm:$0xff]
        %v1202 = vld [vmem:[#allocation11 + $0x1f0] sm:$0xff]
        %v1203 = vld [vmem:[#allocation11 + $0x1f8] sm:$0xff]
        %v1204 = vld [vmem:[%s10] sm:$0x3]
        %v1206 = vlaneseq
        %v1207 = vshrl.u32 %v1206, 7
        %v1208 = vsub.s32 0, %v1207
        %v1209 = vrot.slane %v1204, %v1208
        %v1210 = vlaneseq
        %v1211 = vshrl.u32 %v1210, 7
        %v1212 = vsub.s32 1, %v1211
        %v1213 = vrot.slane %v1204, %v1212
        %1216 = vmatprep.subr.mxu0 %v1141
        %1217 = vmatpush1.msra.mxu0 %v1140
        %1218 = vmatprep.subr.mxu0 %v1143
        %1219 = vmatpush1.msra.mxu0 %v1142
        %1220 = vmatprep.subr.mxu0 %v1145
        %1221 = vmatpush1.msra.mxu0 %v1144
        %1222 = vmatprep.subr.mxu0 %v1147
        %1223 = vmatpush1.msra.mxu0 %v1146
        %1224 = vmatprep.subr.mxu0 %v1149
        %1225 = vmatpush1.msra.mxu0 %v1148
        %1226 = vmatprep.subr.mxu0 %v1151
        %1227 = vmatpush1.msra.mxu0 %v1150
        %1228 = vmatprep.subr.mxu0 %v1153
        %1229 = vmatpush1.msra.mxu0 %v1152
        %1230 = vmatprep.subr.mxu0 %v1155
        %1231 = vmatpush1.msra.mxu0 %v1154
        %1232 = vmatprep.subr.mxu0 %v1157
        %1233 = vmatpush1.msra.mxu0 %v1156
        %1234 = vmatprep.subr.mxu0 %v1159
        %1235 = vmatpush1.msra.mxu0 %v1158
        %1236 = vmatprep.subr.mxu0 %v1161
        %1237 = vmatpush1.msra.mxu0 %v1160
        %1238 = vmatprep.subr.mxu0 %v1163
        %1239 = vmatpush1.msra.mxu0 %v1162
        %1240 = vmatprep.subr.mxu0 %v1165
        %1241 = vmatpush1.msra.mxu0 %v1164
        %1242 = vmatprep.subr.mxu0 %v1167
        %1243 = vmatpush1.msra.mxu0 %v1166
        %1244 = vmatprep.subr.mxu0 %v1169
        %1245 = vmatpush1.msra.mxu0 %v1168
        %1246 = vmatprep.subr.mxu0 %v1171
        %1247 = vmatpush1.msra.mxu0 %v1170
        %1248 = vmatprep.subr.mxu0 %v1173
        %1249 = vmatpush1.msra.mxu0 %v1172
        %1250 = vmatprep.subr.mxu0 %v1175
        %1251 = vmatpush1.msra.mxu0 %v1174
        %1252 = vmatprep.subr.mxu0 %v1177
        %1253 = vmatpush1.msra.mxu0 %v1176
        %1254 = vmatprep.subr.mxu0 %v1179
        %1255 = vmatpush1.msra.mxu0 %v1178
        %1256 = vmatprep.subr.mxu0 %v1181
        %1257 = vmatpush1.msra.mxu0 %v1180
        %1258 = vmatprep.subr.mxu0 %v1183
        %1259 = vmatpush1.msra.mxu0 %v1182
        %1260 = vmatprep.subr.mxu0 %v1185
        %1261 = vmatpush1.msra.mxu0 %v1184
        %1262 = vmatprep.subr.mxu0 %v1187
        %1263 = vmatpush1.msra.mxu0 %v1186
        %1264 = vmatprep.subr.mxu0 %v1189
        %1265 = vmatpush1.msra.mxu0 %v1188
        %1266 = vmatprep.subr.mxu0 %v1191
        %1267 = vmatpush1.msra.mxu0 %v1190
        %1268 = vmatprep.subr.mxu0 %v1193
        %1269 = vmatpush1.msra.mxu0 %v1192
        %1270 = vmatprep.subr.mxu0 %v1195
        %1271 = vmatpush1.msra.mxu0 %v1194
        %1272 = vmatprep.subr.mxu0 %v1197
        %1273 = vmatpush1.msra.mxu0 %v1196
        %1274 = vmatprep.subr.mxu0 %v1199
        %1275 = vmatpush1.msra.mxu0 %v1198
        %1276 = vmatprep.subr.mxu0 %v1201
        %1277 = vmatpush1.msra.mxu0 %v1200
        %1278 = vmatprep.subr.mxu0 %v1203
        %1279 = vmatpush1.msra.mxu0 %v1202
        %1280 = vmatprep.mubr.f32.mxu0 %v1135
        %1281 = vmatmul.mubr.f32.gmra.mrb[0].mxu0 %v1134
        %v1282 = vpop.f32.mrb[0].mxu0
        %v1283 = vadd.f32 %v1209, %v1282
        %v1284 = vpop.f32.mrb[0].mxu0
        %v1285 = vadd.f32 %v1213, %v1284
        %1286 = vmatprep.mubr.f32.mxu0 %v1137
        %1287 = vmatmul.mubr.f32.gmra.mrb[0].mxu0 %v1136
        %v1288 = vpop.f32.mrb[0].mxu0
        %v1289 = vadd.f32 %v1209, %v1288
        %v1290 = vpop.f32.mrb[0].mxu0
        %v1291 = vadd.f32 %v1213, %v1290
        %1292 = vmatprep.mubr.f32.mxu0 %v1139
        %1293 = vmatmul.mubr.f32.gmra.mrb[0].mxu0 %v1138
        %v1294 = vpop.f32.mrb[0].mxu0
        %v1295 = vadd.f32 %v1209, %v1294
        %v1296 = vpop.f32.mrb[0].mxu0
        %v1297 = vadd.f32 %v1213, %v1296
        %1298 = vdwg.mxu0
        %v1299 = vxor.u32 %v1283, 2147483648
        %v1300 = vxor.u32 %v1285, 2147483648
        %v1301 = vxor.u32 %v1289, 2147483648
        %v1302 = vxor.u32 %v1291, 2147483648
        %v1303 = vxor.u32 %v1295, 2147483648
        %v1304 = vxor.u32 %v1297, 2147483648
        %v1305 = vmul.f32 %v1299, 1.442695
        %v1306 = vpow.pop %v1305
        %v1307 = vmul.f32 %v1300, 1.442695
        %v1308 = vpow.pop %v1307
        %v1309 = vmul.f32 %v1301, 1.442695
        %v1310 = vpow.pop %v1309
        %v1311 = vmul.f32 %v1302, 1.442695
        %v1312 = vpow.pop %v1311
        %v1313 = vmul.f32 %v1303, 1.442695
        %v1314 = vpow.pop %v1313
        %v1315 = vmul.f32 %v1304, 1.442695
        %v1316 = vpow.pop %v1315
        %v1317 = vadd.f32 %v1306, 1.0
        %v1318 = vadd.f32 %v1308, 1.0
        %v1319 = vadd.f32 %v1310, 1.0
        %v1320 = vadd.f32 %v1312, 1.0
        %v1321 = vadd.f32 %v1314, 1.0
        %v1322 = vadd.f32 %v1316, 1.0
        %v1323 = vrcp.pop %v1317
        %v1324 = vmul.f32 1.0, %v1323
        %v1325 = vrcp.pop %v1318
        %v1326 = vmul.f32 1.0, %v1325
        %v1327 = vrcp.pop %v1319
        %v1328 = vmul.f32 1.0, %v1327
        %v1329 = vrcp.pop %v1320
        %v1330 = vmul.f32 1.0, %v1329
        %v1331 = vrcp.pop %v1321
        %v1332 = vmul.f32 1.0, %v1331
        %v1333 = vrcp.pop %v1322
        %v1334 = vmul.f32 1.0, %v1333
        %v1335 = vmul.f32 %v1283, %v1324
        %v1336 = vmul.f32 %v1285, %v1326
        %v1337 = vmul.f32 %v1289, %v1328
        %v1338 = vmul.f32 %v1291, %v1330
        %v1339 = vmul.f32 %v1295, %v1332
        %v1340 = vmul.f32 %v1297, %v1334
        %v1341 = vld [vmem:[#allocation13] sm:$0xff]
        %v1342 = vld [vmem:[#allocation13 + $0x8] sm:$0xff]
        %v1343 = vld [vmem:[#allocation13 + $0x10] sm:$0xff]
        %v1344 = vld [vmem:[#allocation13 + $0x18] sm:$0xff]
        %v1345 = vld [vmem:[#allocation13 + $0x20] sm:$0xff]
        %v1346 = vld [vmem:[#allocation13 + $0x28] sm:$0xff]
        %v1347 = vld [vmem:[#allocation13 + $0x30] sm:$0xff]
        %v1348 = vld [vmem:[#allocation13 + $0x38] sm:$0xff]
        %v1349 = vld [vmem:[#allocation13 + $0x40] sm:$0xff]
        %v1350 = vld [vmem:[#allocation13 + $0x48] sm:$0xff]
        %v1351 = vld [vmem:[#allocation13 + $0x50] sm:$0xff]
        %v1352 = vld [vmem:[#allocation13 + $0x58] sm:$0xff]
        %v1353 = vld [vmem:[#allocation13 + $0x60] sm:$0xff]
        %v1354 = vld [vmem:[#allocation13 + $0x68] sm:$0xff]
        %v1355 = vld [vmem:[#allocation13 + $0x70] sm:$0xff]
        %v1356 = vld [vmem:[#allocation13 + $0x78] sm:$0xff]
        %v1357 = vld [vmem:[#allocation13 + $0x80] sm:$0xff]
        %v1358 = vld [vmem:[#allocation13 + $0x88] sm:$0xff]
        %v1359 = vld [vmem:[#allocation13 + $0x90] sm:$0xff]
        %v1360 = vld [vmem:[#allocation13 + $0x98] sm:$0xff]
        %v1361 = vld [vmem:[#allocation13 + $0xa0] sm:$0xff]
        %v1362 = vld [vmem:[#allocation13 + $0xa8] sm:$0xff]
        %v1363 = vld [vmem:[#allocation13 + $0xb0] sm:$0xff]
        %v1364 = vld [vmem:[#allocation13 + $0xb8] sm:$0xff]
        %v1365 = vld [vmem:[#allocation13 + $0xc0] sm:$0xff]
        %v1366 = vld [vmem:[#allocation13 + $0xc8] sm:$0xff]
        %v1367 = vld [vmem:[#allocation13 + $0xd0] sm:$0xff]
        %v1368 = vld [vmem:[#allocation13 + $0xd8] sm:$0xff]
        %v1369 = vld [vmem:[#allocation13 + $0xe0] sm:$0xff]
        %v1370 = vld [vmem:[#allocation13 + $0xe8] sm:$0xff]
        %v1371 = vld [vmem:[#allocation13 + $0xf0] sm:$0xff]
        %v1372 = vld [vmem:[#allocation13 + $0xf8] sm:$0xff]
        %v1373 = vld [vmem:[#allocation13 + $0x100] sm:$0xff]
        %v1374 = vld [vmem:[#allocation13 + $0x108] sm:$0xff]
        %v1375 = vld [vmem:[#allocation13 + $0x110] sm:$0xff]
        %v1376 = vld [vmem:[#allocation13 + $0x118] sm:$0xff]
        %v1377 = vld [vmem:[#allocation13 + $0x120] sm:$0xff]
        %v1378 = vld [vmem:[#allocation13 + $0x128] sm:$0xff]
        %v1379 = vld [vmem:[#allocation13 + $0x130] sm:$0xff]
        %v1380 = vld [vmem:[#allocation13 + $0x138] sm:$0xff]
        %v1381 = vld [vmem:[#allocation13 + $0x140] sm:$0xff]
        %v1382 = vld [vmem:[#allocation13 + $0x148] sm:$0xff]
        %v1383 = vld [vmem:[#allocation13 + $0x150] sm:$0xff]
        %v1384 = vld [vmem:[#allocation13 + $0x158] sm:$0xff]
        %v1385 = vld [vmem:[#allocation13 + $0x160] sm:$0xff]
        %v1386 = vld [vmem:[#allocation13 + $0x168] sm:$0xff]
        %v1387 = vld [vmem:[#allocation13 + $0x170] sm:$0xff]
        %v1388 = vld [vmem:[#allocation13 + $0x178] sm:$0xff]
        %v1389 = vld [vmem:[#allocation13 + $0x180] sm:$0xff]
        %v1390 = vld [vmem:[#allocation13 + $0x188] sm:$0xff]
        %v1391 = vld [vmem:[#allocation13 + $0x190] sm:$0xff]
        %v1392 = vld [vmem:[#allocation13 + $0x198] sm:$0xff]
        %v1393 = vld [vmem:[#allocation13 + $0x1a0] sm:$0xff]
        %v1394 = vld [vmem:[#allocation13 + $0x1a8] sm:$0xff]
        %v1395 = vld [vmem:[#allocation13 + $0x1b0] sm:$0xff]
        %v1396 = vld [vmem:[#allocation13 + $0x1b8] sm:$0xff]
        %v1397 = vld [vmem:[#allocation13 + $0x1c0] sm:$0xff]
        %v1398 = vld [vmem:[#allocation13 + $0x1c8] sm:$0xff]
        %v1399 = vld [vmem:[#allocation13 + $0x1d0] sm:$0xff]
        %v1400 = vld [vmem:[#allocation13 + $0x1d8] sm:$0xff]
        %v1401 = vld [vmem:[#allocation13 + $0x1e0] sm:$0xff]
        %v1402 = vld [vmem:[#allocation13 + $0x1e8] sm:$0xff]
        %v1403 = vld [vmem:[#allocation13 + $0x1f0] sm:$0xff]
        %v1404 = vld [vmem:[#allocation13 + $0x1f8] sm:$0xff]
        %v1405 = vld [vmem:[%s12] sm:$0x3]
        %v1407 = vlaneseq
        %v1408 = vshrl.u32 %v1407, 7
        %v1409 = vsub.s32 0, %v1408
        %v1410 = vrot.slane %v1405, %v1409
        %v1411 = vlaneseq
        %v1412 = vshrl.u32 %v1411, 7
        %v1413 = vsub.s32 1, %v1412
        %v1414 = vrot.slane %v1405, %v1413
        %1417 = vmatprep.subr.mxu0 %v1342
        %1418 = vmatpush1.msra.mxu0 %v1341
        %1419 = vmatprep.subr.mxu0 %v1344
        %1420 = vmatpush1.msra.mxu0 %v1343
        %1421 = vmatprep.subr.mxu0 %v1346
        %1422 = vmatpush1.msra.mxu0 %v1345
        %1423 = vmatprep.subr.mxu0 %v1348
        %1424 = vmatpush1.msra.mxu0 %v1347
        %1425 = vmatprep.subr.mxu0 %v1350
        %1426 = vmatpush1.msra.mxu0 %v1349
        %1427 = vmatprep.subr.mxu0 %v1352
        %1428 = vmatpush1.msra.mxu0 %v1351
        %1429 = vmatprep.subr.mxu0 %v1354
        %1430 = vmatpush1.msra.mxu0 %v1353
        %1431 = vmatprep.subr.mxu0 %v1356
        %1432 = vmatpush1.msra.mxu0 %v1355
        %1433 = vmatprep.subr.mxu0 %v1358
        %1434 = vmatpush1.msra.mxu0 %v1357
        %1435 = vmatprep.subr.mxu0 %v1360
        %1436 = vmatpush1.msra.mxu0 %v1359
        %1437 = vmatprep.subr.mxu0 %v1362
        %1438 = vmatpush1.msra.mxu0 %v1361
        %1439 = vmatprep.subr.mxu0 %v1364
        %1440 = vmatpush1.msra.mxu0 %v1363
        %1441 = vmatprep.subr.mxu0 %v1366
        %1442 = vmatpush1.msra.mxu0 %v1365
        %1443 = vmatprep.subr.mxu0 %v1368
        %1444 = vmatpush1.msra.mxu0 %v1367
        %1445 = vmatprep.subr.mxu0 %v1370
        %1446 = vmatpush1.msra.mxu0 %v1369
        %1447 = vmatprep.subr.mxu0 %v1372
        %1448 = vmatpush1.msra.mxu0 %v1371
        %1449 = vmatprep.subr.mxu0 %v1374
        %1450 = vmatpush1.msra.mxu0 %v1373
        %1451 = vmatprep.subr.mxu0 %v1376
        %1452 = vmatpush1.msra.mxu0 %v1375
        %1453 = vmatprep.subr.mxu0 %v1378
        %1454 = vmatpush1.msra.mxu0 %v1377
        %1455 = vmatprep.subr.mxu0 %v1380
        %1456 = vmatpush1.msra.mxu0 %v1379
        %1457 = vmatprep.subr.mxu0 %v1382
        %1458 = vmatpush1.msra.mxu0 %v1381
        %1459 = vmatprep.subr.mxu0 %v1384
        %1460 = vmatpush1.msra.mxu0 %v1383
        %1461 = vmatprep.subr.mxu0 %v1386
        %1462 = vmatpush1.msra.mxu0 %v1385
        %1463 = vmatprep.subr.mxu0 %v1388
        %1464 = vmatpush1.msra.mxu0 %v1387
        %1465 = vmatprep.subr.mxu0 %v1390
        %1466 = vmatpush1.msra.mxu0 %v1389
        %1467 = vmatprep.subr.mxu0 %v1392
        %1468 = vmatpush1.msra.mxu0 %v1391
        %1469 = vmatprep.subr.mxu0 %v1394
        %1470 = vmatpush1.msra.mxu0 %v1393
        %1471 = vmatprep.subr.mxu0 %v1396
        %1472 = vmatpush1.msra.mxu0 %v1395
        %1473 = vmatprep.subr.mxu0 %v1398
        %1474 = vmatpush1.msra.mxu0 %v1397
        %1475 = vmatprep.subr.mxu0 %v1400
        %1476 = vmatpush1.msra.mxu0 %v1399
        %1477 = vmatprep.subr.mxu0 %v1402
        %1478 = vmatpush1.msra.mxu0 %v1401
        %1479 = vmatprep.subr.mxu0 %v1404
        %1480 = vmatpush1.msra.mxu0 %v1403
        %1481 = vmatprep.mubr.f32.mxu0 %v1336
        %1482 = vmatmul.mubr.f32.gmra.mrb[0].mxu0 %v1335
        %v1483 = vpop.f32.mrb[0].mxu0
        %v1484 = vadd.f32 %v1410, %v1483
        %v1485 = vpop.f32.mrb[0].mxu0
        %v1486 = vadd.f32 %v1414, %v1485
        %1487 = vmatprep.mubr.f32.mxu0 %v1338
        %1488 = vmatmul.mubr.f32.gmra.mrb[0].mxu0 %v1337
        %v1489 = vpop.f32.mrb[0].mxu0
        %v1490 = vadd.f32 %v1410, %v1489
        %v1491 = vpop.f32.mrb[0].mxu0
        %v1492 = vadd.f32 %v1414, %v1491
        %1493 = vmatprep.mubr.f32.mxu0 %v1340
        %1494 = vmatmul.mubr.f32.gmra.mrb[0].mxu0 %v1339
        %v1495 = vpop.f32.mrb[0].mxu0
        %v1496 = vadd.f32 %v1410, %v1495
        %v1497 = vpop.f32.mrb[0].mxu0
        %v1498 = vadd.f32 %v1414, %v1497
        %1499 = vdwg.mxu0
        %v1500 = vxor.u32 %v1484, 2147483648
        %v1501 = vxor.u32 %v1486, 2147483648
        %v1502 = vxor.u32 %v1490, 2147483648
        %v1503 = vxor.u32 %v1492, 2147483648
        %v1504 = vxor.u32 %v1496, 2147483648
        %v1505 = vxor.u32 %v1498, 2147483648
        %v1506 = vmul.f32 %v1500, 1.442695
        %v1507 = vpow.pop %v1506
        %v1508 = vmul.f32 %v1501, 1.442695
        %v1509 = vpow.pop %v1508
        %v1510 = vmul.f32 %v1502, 1.442695
        %v1511 = vpow.pop %v1510
        %v1512 = vmul.f32 %v1503, 1.442695
        %v1513 = vpow.pop %v1512
        %v1514 = vmul.f32 %v1504, 1.442695
        %v1515 = vpow.pop %v1514
        %v1516 = vmul.f32 %v1505, 1.442695
        %v1517 = vpow.pop %v1516
        %v1518 = vadd.f32 %v1507, 1.0
        %v1519 = vadd.f32 %v1509, 1.0
        %v1520 = vadd.f32 %v1511, 1.0
        %v1521 = vadd.f32 %v1513, 1.0
        %v1522 = vadd.f32 %v1515, 1.0
        %v1523 = vadd.f32 %v1517, 1.0
        %v1524 = vrcp.pop %v1518
        %v1525 = vmul.f32 1.0, %v1524
        %v1526 = vrcp.pop %v1519
        %v1527 = vmul.f32 1.0, %v1526
        %v1528 = vrcp.pop %v1520
        %v1529 = vmul.f32 1.0, %v1528
        %v1530 = vrcp.pop %v1521
        %v1531 = vmul.f32 1.0, %v1530
        %v1532 = vrcp.pop %v1522
        %v1533 = vmul.f32 1.0, %v1532
        %v1534 = vrcp.pop %v1523
        %v1535 = vmul.f32 1.0, %v1534
        %v1536 = vmul.f32 %v1484, %v1525
        %v1537 = vmul.f32 %v1486, %v1527
        %v1538 = vmul.f32 %v1490, %v1529
        %v1539 = vmul.f32 %v1492, %v1531
        %v1540 = vmul.f32 %v1496, %v1533
        %v1541 = vmul.f32 %v1498, %v1535
        %v1542 = vld [vmem:[#allocation14] sm:$0xff]
        %v1543 = vld [vmem:[#allocation14 + $0x8] sm:$0xff]
        %v1544 = vld [vmem:[#allocation14 + $0x10] sm:$0xff]
        %v1545 = vld [vmem:[#allocation14 + $0x18] sm:$0xff]
        %v1546 = vld [vmem:[#allocation14 + $0x20] sm:$0xff]
        %v1547 = vld [vmem:[#allocation14 + $0x28] sm:$0xff]
        %v1548 = vld [vmem:[#allocation14 + $0x30] sm:$0xff]
        %v1549 = vld [vmem:[#allocation14 + $0x38] sm:$0xff]
        %v1550 = vld [vmem:[#allocation14 + $0x40] sm:$0xff]
        %v1551 = vld [vmem:[#allocation14 + $0x48] sm:$0xff]
        %v1552 = vld [vmem:[#allocation14 + $0x50] sm:$0xff]
        %v1553 = vld [vmem:[#allocation14 + $0x58] sm:$0xff]
        %v1554 = vld [vmem:[#allocation14 + $0x60] sm:$0xff]
        %v1555 = vld [vmem:[#allocation14 + $0x68] sm:$0xff]
        %v1556 = vld [vmem:[#allocation14 + $0x70] sm:$0xff]
        %v1557 = vld [vmem:[#allocation14 + $0x78] sm:$0xff]
        %v1558 = vld [vmem:[#allocation14 + $0x80] sm:$0xff]
        %v1559 = vld [vmem:[#allocation14 + $0x88] sm:$0xff]
        %v1560 = vld [vmem:[#allocation14 + $0x90] sm:$0xff]
        %v1561 = vld [vmem:[#allocation14 + $0x98] sm:$0xff]
        %v1562 = vld [vmem:[#allocation14 + $0xa0] sm:$0xff]
        %v1563 = vld [vmem:[#allocation14 + $0xa8] sm:$0xff]
        %v1564 = vld [vmem:[#allocation14 + $0xb0] sm:$0xff]
        %v1565 = vld [vmem:[#allocation14 + $0xb8] sm:$0xff]
        %v1566 = vld [vmem:[#allocation14 + $0xc0] sm:$0xff]
        %v1567 = vld [vmem:[#allocation14 + $0xc8] sm:$0xff]
        %v1568 = vld [vmem:[#allocation14 + $0xd0] sm:$0xff]
        %v1569 = vld [vmem:[#allocation14 + $0xd8] sm:$0xff]
        %v1570 = vld [vmem:[#allocation14 + $0xe0] sm:$0xff]
        %v1571 = vld [vmem:[#allocation14 + $0xe8] sm:$0xff]
        %v1572 = vld [vmem:[#allocation14 + $0xf0] sm:$0xff]
        %v1573 = vld [vmem:[#allocation14 + $0xf8] sm:$0xff]
        %v1574 = vld [vmem:[%s14] sm:$0x1]
        %v1576 = vlaneseq
        %v1577 = vshrl.u32 %v1576, 7
        %v1578 = vsub.s32 0, %v1577
        %v1579 = vrot.slane %v1574, %v1578
        %1581 = vmatprep.subr.mxu0 0.0
        %1582 = vmatpush1.msra.mxu0 %v1542
        %1583 = vmatprep.subr.mxu0 0.0
        %1584 = vmatpush1.msra.mxu0 %v1543
        %1585 = vmatprep.subr.mxu0 0.0
        %1586 = vmatpush1.msra.mxu0 %v1544
        %1587 = vmatprep.subr.mxu0 0.0
        %1588 = vmatpush1.msra.mxu0 %v1545
        %1589 = vmatprep.subr.mxu0 0.0
        %1590 = vmatpush1.msra.mxu0 %v1546
        %1591 = vmatprep.subr.mxu0 0.0
        %1592 = vmatpush1.msra.mxu0 %v1547
        %1593 = vmatprep.subr.mxu0 0.0
        %1594 = vmatpush1.msra.mxu0 %v1548
        %1595 = vmatprep.subr.mxu0 0.0
        %1596 = vmatpush1.msra.mxu0 %v1549
        %1597 = vmatprep.subr.mxu0 0.0
        %1598 = vmatpush1.msra.mxu0 %v1550
        %1599 = vmatprep.subr.mxu0 0.0
        %1600 = vmatpush1.msra.mxu0 %v1551
        %1601 = vmatprep.subr.mxu0 0.0
        %1602 = vmatpush1.msra.mxu0 %v1552
        %1603 = vmatprep.subr.mxu0 0.0
        %1604 = vmatpush1.msra.mxu0 %v1553
        %1605 = vmatprep.subr.mxu0 0.0
        %1606 = vmatpush1.msra.mxu0 %v1554
        %1607 = vmatprep.subr.mxu0 0.0
        %1608 = vmatpush1.msra.mxu0 %v1555
        %1609 = vmatprep.subr.mxu0 0.0
        %1610 = vmatpush1.msra.mxu0 %v1556
        %1611 = vmatprep.subr.mxu0 0.0
        %1612 = vmatpush1.msra.mxu0 %v1557
        %1613 = vmatprep.subr.mxu0 0.0
        %1614 = vmatpush1.msra.mxu0 %v1558
        %1615 = vmatprep.subr.mxu0 0.0
        %1616 = vmatpush1.msra.mxu0 %v1559
        %1617 = vmatprep.subr.mxu0 0.0
        %1618 = vmatpush1.msra.mxu0 %v1560
        %1619 = vmatprep.subr.mxu0 0.0
        %1620 = vmatpush1.msra.mxu0 %v1561
        %1621 = vmatprep.subr.mxu0 0.0
        %1622 = vmatpush1.msra.mxu0 %v1562
        %1623 = vmatprep.subr.mxu0 0.0
        %1624 = vmatpush1.msra.mxu0 %v1563
        %1625 = vmatprep.subr.mxu0 0.0
        %1626 = vmatpush1.msra.mxu0 %v1564
        %1627 = vmatprep.subr.mxu0 0.0
        %1628 = vmatpush1.msra.mxu0 %v1565
        %1629 = vmatprep.subr.mxu0 0.0
        %1630 = vmatpush1.msra.mxu0 %v1566
        %1631 = vmatprep.subr.mxu0 0.0
        %1632 = vmatpush1.msra.mxu0 %v1567
        %1633 = vmatprep.subr.mxu0 0.0
        %1634 = vmatpush1.msra.mxu0 %v1568
        %1635 = vmatprep.subr.mxu0 0.0
        %1636 = vmatpush1.msra.mxu0 %v1569
        %1637 = vmatprep.subr.mxu0 0.0
        %1638 = vmatpush1.msra.mxu0 %v1570
        %1639 = vmatprep.subr.mxu0 0.0
        %1640 = vmatpush1.msra.mxu0 %v1571
        %1641 = vmatprep.subr.mxu0 0.0
        %1642 = vmatpush1.msra.mxu0 %v1572
        %1643 = vmatprep.subr.mxu0 0.0
        %1644 = vmatpush1.msra.mxu0 %v1573
        %1645 = vmatprep.mubr.f32.mxu0 %v1537
        %1646 = vmatmul.mubr.f32.gmra.mrb[0].mxu0 %v1536
        %v1647 = vpop.f32.mrb[0].mxu0
        %v1648 = vadd.f32 %v1579, %v1647
        %v1649 = vpop.f32.mrb[0].mxu0
        %1650 = vmatprep.mubr.f32.mxu0 %v1539
        %1651 = vmatmul.mubr.f32.gmra.mrb[0].mxu0 %v1538
        %v1652 = vpop.f32.mrb[0].mxu0
        %v1653 = vadd.f32 %v1579, %v1652
        %v1654 = vpop.f32.mrb[0].mxu0
        %1655 = vmatprep.mubr.f32.mxu0 %v1541
        %1656 = vmatmul.mubr.f32.gmra.mrb[0].mxu0 %v1540
        %v1657 = vpop.f32.mrb[0].mxu0
        %v1658 = vadd.f32 %v1579, %v1657
        %v1659 = vpop.f32.mrb[0].mxu0
        %1660 = vdwg.mxu0
        %v1661 = vadd.f32 %v958, %v1648
        %v1662 = vadd.f32 %v963, %v1653
        %v1663 = vadd.f32 %v968, %v1658
        %1664 = vst [vmem:[%s614] sm:$0xff] %v1661
        %1665 = vst [vmem:[%s614 + $0x8] sm:$0xff] %v1662
        %1666 = vst [vmem:[%s614 + $0x10] sm:$0xff] %v1663
        %s1667 = sand.u32 %s364, 1
        %s1668 = scalar_lea.sflag [#allocation4], %s1667
        %s1669 = sand.u32 %s364, 1
        %s1670 = smul.addr %s1669, 24
        %s1671 = scalar_lea.vmem [#allocation16], %s1670
        // Predicated region
        $region113: #{tpu_custom_call.1} parent=79 // pred_check
          %p1672 = pneg %p374
        $region114: #{tpu_custom_call.1} parent=79 // pred_check_branch
          %1674 = sbr.rel (%p1672) target = $region116
        $region115: #{tpu_custom_call.1} parent=79 // pred_region
          %s1675 = smul.u32 3, %s36
          %s1677 = ssub.s32 384, 384
          %1678 = vsyncadd %s1668, %s1677
          %s1679 = smul.addr %s1675, 128
          %s1680 = scalar_lea.hbm %s15, %s1679
          %s1681 = sshll.u32 %s1671, 4
          %s1682 = int_to_ptr.vmem [resolvable:$true] %s1681
          %1687 = dma.vmem_to_hbm [thread:$0]  %s1682, 384, %s1680, %s1668, 128, 128, 8
        $region116: #{tpu_custom_call.1} parent=79 // pred_fallthru
          _
      $region80: #{tpu_custom_call.1} parent=5 // pred_fallthru
        _
      %p1688 = scmp.le.s32.totalorder 2, %s31
      // Predicated region
      $region117: #{tpu_custom_call.1} parent=5 // pred_check
        %p1689 = pneg %p1688
      $region118: #{tpu_custom_call.1} parent=5 // pred_check_branch
        %1691 = sbr.rel (%p1689) target = $region120
      $region119: #{tpu_custom_call.1} parent=5 // pred_region
        %s1692 = ssub.s32 %s31, 2
        // Predicated region
        $region121: #{tpu_custom_call.1} parent=119 // pred_check
          %p1693 = pneg %p380
        $region122: #{tpu_custom_call.1} parent=119 // pred_check_branch
          %1695 = sbr.rel (%p1693) target = $region124
        $region123: #{tpu_custom_call.1} parent=119 // pred_region
          %s1696 = sand.u32 %s365, 1
          %s1697 = scalar_lea.sflag [#allocation4], %s1696
          %s1698 = sand.u32 %s365, 1
          %s1699 = smul.addr %s1698, 24
          %s1700 = scalar_lea.vmem [#allocation16], %s1699
          %1701 = dma.done %s1697, 384
        $region124: #{tpu_custom_call.1} parent=119 // pred_fallthru
          _
      $region120: #{tpu_custom_call.1} parent=5 // pred_fallthru
        _
    $region6: #{tpu_custom_call.1} parent=1 // loop_footer
      %s35 = sadd.s32 1, %s31
    $region7: #{tpu_custom_call.1} parent=1 // loop_footer_branch
      %30 = sbr.rel target = $region3
    $region8: #{tpu_custom_call.1} parent=1 // loop_exit
      _
    %1702 = vsyncpa [#allocation3], 1
    %s1703 = scalar_lea.sflag [#allocation3], 1
    %1704 = vsyncpa %s1703, 1
    %1705 = vsyncpa [#allocation6], 1
    %1706 = vsyncpa [#allocation9], 1
    %1707 = vsyncpa [#allocation12], 1
    %1708 = vsyncpa [#allocation15], 1
    %1709 = vsyncpa [#allocation4], 1
    %s1710 = scalar_lea.sflag [#allocation4], 1
    %1711 = vsyncpa %s1710, 1

</llo_original>
